<compile_context>
chip_gen: v5e
topology: v5e:2x2
jax: 0.10.0
libtpu: 0.0.40
codegen_flags: <defaults>
</compile_context>

<pallas_src>
import jax
import jax.numpy as jnp
import numpy as np
from jax.experimental import pallas as pl
from jax.experimental.pallas import tpu as pltpu


def _round_up(x, m):
    return ((x + m - 1) // m) * m


def _pad_to(arr, shape):
    pads = [(0, t - s) for s, t in zip(arr.shape, shape)]
    if any(p[1] for p in pads):
        return jnp.pad(arr, pads)
    return arr


# --------------------------------------------------------------------------------------
# Kernel body
# --------------------------------------------------------------------------------------
def _head_kernel(x_ref, wdn_ref, bdn_ref, wup_ref, bup_ref, res_ref, out_ref):
    # x_ref:   (TB, Dp)  input dtype (f32 or bf16)
    # wdn_ref: (Dp, Hp)  bf16        bdn_ref: (1, Hp) f32
    # wup_ref: (Hp, Dp)  bf16        bup_ref: (1, Dp) f32
    # res_ref: (1, 1)    f32 scalar in SMEM
    # out_ref: (TB, Dp)
    x = x_ref[...]

    # Down-projection D -> D//r (bf16 operands, f32 accumulation on the MXU) + ReLU
    h = jnp.dot(x.astype(jnp.bfloat16), wdn_ref[...],
                preferred_element_type=jnp.float32)
    h = jnp.maximum(h + bdn_ref[...], 0.0)

    # Up-projection D//r -> D + ReLU
    h = jnp.dot(h.astype(jnp.bfloat16), wup_ref[...],
                preferred_element_type=jnp.float32)
    h = jnp.maximum(h + bup_ref[...], 0.0)

    # Learnable residual blend: r*h + (1-r)*x == x + r*(h - x)  (one fewer vector multiply)
    r = res_ref[0, 0]
    xf = x.astype(jnp.float32)
    out_ref[...] = (xf + r * (h - xf)).astype(out_ref.dtype)


# --------------------------------------------------------------------------------------
# Sizing helpers (generation-aware VMEM budgeting)
# --------------------------------------------------------------------------------------
def _vmem_capacity_bytes():
    try:
        return int(pltpu.get_tpu_info().vmem_capacity_bytes)
    except Exception:
        return 64 * 1024 * 1024  # conservative fallback = v7x per-TensorCore VMEM


def _weight_bytes(Dp, Hp):
    # two bf16 weight matrices (Dp*Hp each) + f32 biases
    return 2 * 2 * Dp * Hp + 4 * (Hp + Dp)


def _per_row_bytes(Dp, Hp, io_itemsize):
    per_row = Dp * 4 * io_itemsize          # double-buffered x and out tiles
    per_row += (Dp + Hp) * 4                # f32 intermediates (h, blend)
    per_row += (Dp + Hp) * 2                # bf16 casts fed to the MXU
    return per_row


def _select_tile_rows(B, Dp, Hp, io_itemsize, max_tile_rows):
    """Pick the batch tile TB from the per-core VMEM budget. Returns None if the resident
    bf16 weights themselves do not fit (caller falls back / should stream weights)."""
    budget = int(_vmem_capacity_bytes() * 0.9)           # ~10% headroom for Mosaic internals
    slack = 4 << 20
    w_bytes = _weight_bytes(Dp, Hp)
    if w_bytes + slack >= budget:
        return None
    avail = budget - w_bytes - slack
    tb = min(max_tile_rows, avail // _per_row_bytes(Dp, Hp, io_itemsize))
    tb = max(8, (tb // 8) * 8)
    # Megacore load balance (v7x has 2 TensorCores): ensure >= 2 grid steps when B allows.
    if B > 8:
        tb = min(tb, _round_up(pl.cdiv(B, 2), 8))
    tb = min(tb, _round_up(B, 8))
    return int(tb)


def _vmem_requirement_bytes(TB, Dp, Hp, io_itemsize, weight_buffers):
    total = _weight_bytes(Dp, Hp) * weight_buffers
    total += TB * _per_row_bytes(Dp, Hp, io_itemsize)
    total += 4 << 20
    return int(min(total, _vmem_capacity_bytes()))


# --------------------------------------------------------------------------------------
# Parameter preparation (done ONCE, outside the per-call path)
# --------------------------------------------------------------------------------------
def prepare_params(w_down, b_down, w_up, b_up):
    """Pad lane dims to multiples of 128 and cast weights to bf16 once.
    Padding is exact: padded weight rows/cols and biases are zero, so padded lanes stay zero."""
    D, H = w_down.shape
    assert w_up.shape == (H, D)
    Dp, Hp = _round_up(D, 128), _round_up(H, 128)
    return {
        "D": D, "H": H, "Dp": Dp, "Hp": Hp,
        "wdn": _pad_to(jnp.asarray(w_down), (Dp, Hp)).astype(jnp.bfloat16),
        "bdn": _pad_to(jnp.asarray(b_down), (Hp,)).reshape(1, Hp).astype(jnp.float32),
        "wup": _pad_to(jnp.asarray(w_up), (Hp, Dp)).astype(jnp.bfloat16),
        "bup": _pad_to(jnp.asarray(b_up), (Dp,)).reshape(1, Dp).astype(jnp.float32),
    }


def _jnp_forward(x, params, residual):
    """Fallback path (tiny problems / weights too large for VMEM). Same numerics as the kernel."""
    D, Dp = params["D"], params["Dp"]
    xf = x.astype(jnp.float32)
    xp = xf if Dp == D else jnp.pad(xf, ((0, 0), (0, Dp - D)))
    h = jnp.maximum(jnp.dot(xp.astype(jnp.bfloat16), params["wdn"],
                            preferred_element_type=jnp.float32) + params["bdn"], 0.0)
    h = jnp.maximum(jnp.dot(h.astype(jnp.bfloat16), params["wup"],
                            preferred_element_type=jnp.float32) + params["bup"], 0.0)
    r = jnp.asarray(residual, jnp.float32)
    out = xp + r * (h - xp)
    return out[:, :D].astype(x.dtype)


# --------------------------------------------------------------------------------------
# pallas_call builder + public wrapper
# --------------------------------------------------------------------------------------
def _build_call(B, Dp, Hp, TB, x_dtype, single_buffer_weights, vmem_limit, cost):
    if single_buffer_weights:
        wkw = dict(pipeline_mode=pl.Buffered(1))  # grid-invariant operands: no double buffering
    else:
        wkw = {}
    in_specs = [
        pl.BlockSpec((TB, Dp), lambda i: (i, 0)),                 # x tile (pipelined)
        pl.BlockSpec((Dp, Hp), lambda i: (0, 0), **wkw),          # w_down (VMEM-resident)
        pl.BlockSpec((1, Hp), lambda i: (0, 0), **wkw),           # b_down
        pl.BlockSpec((Hp, Dp), lambda i: (0, 0), **wkw),          # w_up
        pl.BlockSpec((1, Dp), lambda i: (0, 0), **wkw),           # b_up
        pl.BlockSpec(memory_space=pltpu.MemorySpace.SMEM),        # residual scalar
    ]
    return pl.pallas_call(
        _head_kernel,
        out_shape=jax.ShapeDtypeStruct((B, Dp), x_dtype),
        grid=(pl.cdiv(B, TB),),
        in_specs=in_specs,
        out_specs=pl.BlockSpec((TB, Dp), lambda i: (i, 0)),
        compiler_params=pltpu.CompilerParams(
            dimension_semantics=("parallel",),
            vmem_limit_bytes=vmem_limit,
        ),
        cost_estimate=cost,
    )


def residual_learnable_head(x, params, residual, *, max_tile_rows=512, use_pallas=None):
    """x: (B, D). params: from prepare_params(). residual: scalar."""
    B, D = x.shape
    assert D == params["D"]
    Dp, Hp = params["Dp"], params["Hp"]
    io_itemsize = jnp.dtype(x.dtype).itemsize

    if use_pallas is None:
        # Tiny heads: XLA fusion beats a one-step kernel + padding waste.
        use_pallas = (D >= 512 and B >= 64) or (D >= 128 and B >= 512)

    TB = _select_tile_rows(B, Dp, Hp, io_itemsize, max_tile_rows)
    if TB is None:
        # TODO(synk): stream bf16/fp8 weight tiles from HBM (memory_space=pl.ANY +
        # pltpu.emit_pipeline) when resident weights exceed the per-core VMEM budget (D ~ 6-8k).
        use_pallas = False

    if not use_pallas:
        return _jnp_forward(x, params, residual)

    res = jnp.asarray(residual, jnp.float32).reshape(1, 1)
    x_in = x if Dp == D else jnp.pad(x, ((0, 0), (0, Dp - D)))
    operands = (x_in, params["wdn"], params["bdn"], params["wup"], params["bup"], res)

    cost = pl.CostEstimate(
        flops=4 * B * Dp * Hp,
        transcendentals=0,
        bytes_accessed=2 * B * Dp * io_itemsize + _weight_bytes(Dp, Hp),
    )

    try:
        # Preferred: single-buffered grid-invariant weights (halves their VMEM residency).
        out = _build_call(B, Dp, Hp, TB, x.dtype, True,
                          _vmem_requirement_bytes(TB, Dp, Hp, io_itemsize, 1), cost)(*operands)
    except Exception:
        # Fallback if this Pallas build rejects pipeline_mode: default (double) buffering.
        out = _build_call(B, Dp, Hp, TB, x.dtype, False,
                          _vmem_requirement_bytes(TB, Dp, Hp, io_itemsize, 2), cost)(*operands)

    return out if Dp == D else out[:, :D]


# --------------------------------------------------------------------------------------
# Reference + demo
# --------------------------------------------------------------------------------------
def init_params(key, in_dim, bottleneck_reduction_ratio):
    """nn.Linear-style init; weights stored as (in_features, out_features)."""
    hidden = in_dim // bottleneck_reduction_ratio
    dims = [(in_dim, hidden), (hidden, in_dim)]
    weights, biases = [], []
    for d_in, d_out in dims:
        key, kw, kb = jax.random.split(key, 3)
        bound = 1.0 / np.sqrt(d_in)
        weights.append(jax.random.uniform(kw, (d_in, d_out), jnp.float32, -bound, bound))
        biases.append(jax.random.uniform(kb, (d_out,), jnp.float32, -bound, bound))
    return weights, biases


def reference_forward(x, w_down, b_down, w_up, b_up, residual):
    h = jnp.maximum(x @ w_down + b_down, 0.0)
    h = jnp.maximum(h @ w_up + b_up, 0.0)
    return residual * h + (1.0 - residual) * x


if __name__ == "__main__":
    # Small shapes consistent with the module's forward on [batch, in_dim] embeddings.
    in_dim = 256
    bottleneck_reduction_ratio = 4
    initial_residual_ratio = 0.3
    batch = 48

    key = jax.random.PRNGKey(0)
    key, kx = jax.random.split(key)
    x = jax.random.normal(kx, (batch, in_dim), jnp.float32)

    (w_down, w_up), (b_down, b_up) = init_params(key, in_dim, bottleneck_reduction_ratio)
    residual = jnp.float32(initial_residual_ratio)

    # Pad/cast weights exactly once (outside the per-call path).
    params = prepare_params(w_down, b_down, w_up, b_up)

    # Force the Pallas path at these demo sizes so the kernel is exercised.
    out = residual_learnable_head(x, params, residual, use_pallas=True)
    out = jax.block_until_ready(out)

    ref = reference_forward(x, w_down, b_down, w_up, b_up, residual)
    # bf16 matmul operands with f32 accumulation -> loosened tolerance vs the pure-f32 reference.
    np.testing.assert_allclose(np.asarray(out), np.asarray(ref), rtol=2e-2, atol=2e-2)

    print("KERNEL_OK")
</pallas_src>

<mosaic_0001>
module attributes {stable_mosaic.version = 11 : i64} {
  func.func @_head_kernel(%arg0: i32, %arg1: memref<24x256xf32, #tpu.memory_space<vmem>>, %arg2: memref<256x128xbf16, #tpu.memory_space<vmem>>, %arg3: memref<1x128xf32, #tpu.memory_space<vmem>>, %arg4: memref<128x256xbf16, #tpu.memory_space<vmem>>, %arg5: memref<1x256xf32, #tpu.memory_space<vmem>>, %arg6: memref<1x1xf32, #tpu.memory_space<smem>>, %arg7: memref<24x256xf32, #tpu.memory_space<vmem>>) attributes {dimension_semantics = [#tpu.dimension_semantics<parallel>], iteration_bounds = array<i64: 2>, scalar_prefetch = 0 : i64, scratch_operands = 0 : i64, tpu.core_type = #tpu.core_type<tc>, window_params = [{transform_indices = @transform_0, window_bounds = array<i64: 24, 256>}, {pipeline_mode = #tpu.pipeline_mode<synchronous>, transform_indices = @transform_1, window_bounds = array<i64: 256, 128>}, {pipeline_mode = #tpu.pipeline_mode<synchronous>, transform_indices = @transform_2, window_bounds = array<i64: 1, 128>}, {pipeline_mode = #tpu.pipeline_mode<synchronous>, transform_indices = @transform_3, window_bounds = array<i64: 128, 256>}, {pipeline_mode = #tpu.pipeline_mode<synchronous>, transform_indices = @transform_4, window_bounds = array<i64: 1, 256>}, {transform_indices = @transform_5, window_bounds = array<i64: 1, 1>}, {transform_indices = @transform_6, window_bounds = array<i64: 24, 256>}]} {
    %c0 = arith.constant 0 : index
    %c0_0 = arith.constant 0 : index
    %0 = vector.load %arg1[%c0, %c0_0] : memref<24x256xf32, #tpu.memory_space<vmem>>, vector<24x256xf32>
    %1 = arith.truncf %0 : vector<24x256xf32> to vector<24x256xbf16>
    %c0_1 = arith.constant 0 : index
    %c0_2 = arith.constant 0 : index
    %2 = vector.load %arg2[%c0_1, %c0_2] : memref<256x128xbf16, #tpu.memory_space<vmem>>, vector<256x128xbf16>
    %cst = arith.constant dense<0.000000e+00> : vector<24x128xf32>
    %3 = tpu.matmul %1, %2, %cst {dimension_numbers = #tpu.dot_dimension_numbers<[1], [0], [0], [1], [0, 0, 1, 1], [], []>} : vector<24x256xbf16>, vector<256x128xbf16>, vector<24x128xf32> -> vector<24x128xf32>
    %c0_3 = arith.constant 0 : index
    %c0_4 = arith.constant 0 : index
    %4 = vector.load %arg3[%c0_3, %c0_4] : memref<1x128xf32, #tpu.memory_space<vmem>>, vector<1x128xf32>
    %5 = vector.broadcast %4 : vector<1x128xf32> to vector<24x128xf32>
    %6 = arith.addf %3, %5 : vector<24x128xf32>
    %cst_5 = arith.constant 0.000000e+00 : f32
    %7 = vector.broadcast %cst_5 : f32 to vector<24x128xf32>
    %8 = arith.maximumf %6, %7 : vector<24x128xf32>
    %9 = arith.truncf %8 : vector<24x128xf32> to vector<24x128xbf16>
    %c0_6 = arith.constant 0 : index
    %c0_7 = arith.constant 0 : index
    %10 = vector.load %arg4[%c0_6, %c0_7] : memref<128x256xbf16, #tpu.memory_space<vmem>>, vector<128x256xbf16>
    %cst_8 = arith.constant dense<0.000000e+00> : vector<24x256xf32>
    %11 = tpu.matmul %9, %10, %cst_8 {dimension_numbers = #tpu.dot_dimension_numbers<[1], [0], [0], [1], [0, 0, 1, 1], [], []>} : vector<24x128xbf16>, vector<128x256xbf16>, vector<24x256xf32> -> vector<24x256xf32>
    %c0_9 = arith.constant 0 : index
    %c0_10 = arith.constant 0 : index
    %12 = vector.load %arg5[%c0_9, %c0_10] : memref<1x256xf32, #tpu.memory_space<vmem>>, vector<1x256xf32>
    %13 = vector.broadcast %12 : vector<1x256xf32> to vector<24x256xf32>
    %14 = arith.addf %11, %13 : vector<24x256xf32>
    %cst_11 = arith.constant 0.000000e+00 : f32
    %15 = vector.broadcast %cst_11 : f32 to vector<24x256xf32>
    %16 = arith.maximumf %14, %15 : vector<24x256xf32>
    %c0_12 = arith.constant 0 : index
    %c0_13 = arith.constant 0 : index
    %17 = memref.load %arg6[%c0_12, %c0_13] : memref<1x1xf32, #tpu.memory_space<smem>>
    %18 = arith.subf %16, %0 : vector<24x256xf32>
    %19 = vector.broadcast %17 : f32 to vector<24x256xf32>
    %20 = arith.mulf %19, %18 : vector<24x256xf32>
    %21 = arith.addf %0, %20 : vector<24x256xf32>
    %c0_14 = arith.constant 0 : index
    %c0_15 = arith.constant 0 : index
    %22 = vector.load %arg7[%c0_14, %c0_15] : memref<24x256xf32, #tpu.memory_space<vmem>>, vector<24x256xf32>
    tpu.vector_store %arg7[%c0_14, %c0_15], %21 {strides = array<i32>} : memref<24x256xf32, #tpu.memory_space<vmem>>, vector<24x256xf32>,
    return
  }
  func.func @transform_0(%arg0: i32) -> (i32, i32) {
    %c0_i32 = arith.constant 0 : i32
    %c0_i32_0 = arith.constant 0 : i32
    return %arg0, %c0_i32 : i32, i32
  }
  func.func @transform_1(%arg0: i32) -> (i32, i32) {
    %c0_i32 = arith.constant 0 : i32
    %c0_i32_0 = arith.constant 0 : i32
    %c0_i32_1 = arith.constant 0 : i32
    return %c0_i32, %c0_i32_0 : i32, i32
  }
  func.func @transform_2(%arg0: i32) -> (i32, i32) {
    %c0_i32 = arith.constant 0 : i32
    %c0_i32_0 = arith.constant 0 : i32
    %c0_i32_1 = arith.constant 0 : i32
    return %c0_i32, %c0_i32_0 : i32, i32
  }
  func.func @transform_3(%arg0: i32) -> (i32, i32) {
    %c0_i32 = arith.constant 0 : i32
    %c0_i32_0 = arith.constant 0 : i32
    %c0_i32_1 = arith.constant 0 : i32
    return %c0_i32, %c0_i32_0 : i32, i32
  }
  func.func @transform_4(%arg0: i32) -> (i32, i32) {
    %c0_i32 = arith.constant 0 : i32
    %c0_i32_0 = arith.constant 0 : i32
    %c0_i32_1 = arith.constant 0 : i32
    return %c0_i32, %c0_i32_0 : i32, i32
  }
  func.func @transform_5(%arg0: i32) -> (i32, i32) {
    %c0_i32 = arith.constant 0 : i32
    %c0_i32_0 = arith.constant 0 : i32
    %c0_i32_1 = arith.constant 0 : i32
    return %c0_i32, %c0_i32_0 : i32, i32
  }
  func.func @transform_6(%arg0: i32) -> (i32, i32) {
    %c0_i32 = arith.constant 0 : i32
    %c0_i32_0 = arith.constant 0 : i32
    return %arg0, %c0_i32 : i32, i32
  }
}

module attributes {stable_mosaic.version = 11 : i64} {
  func.func @_head_kernel(%arg0: i32, %arg1: memref<24x256xf32, #tpu.memory_space<vmem>>, %arg2: memref<256x128xbf16, #tpu.memory_space<vmem>>, %arg3: memref<1x128xf32, #tpu.memory_space<vmem>>, %arg4: memref<128x256xbf16, #tpu.memory_space<vmem>>, %arg5: memref<1x256xf32, #tpu.memory_space<vmem>>, %arg6: memref<1x1xf32, #tpu.memory_space<smem>>, %arg7: memref<24x256xf32, #tpu.memory_space<vmem>>) attributes {dimension_semantics = [#tpu.dimension_semantics<parallel>], iteration_bounds = array<i64: 2>, scalar_prefetch = 0 : i64, scratch_operands = 0 : i64, tpu.core_type = #tpu.core_type<tc>, window_params = [{transform_indices = @transform_0, window_bounds = array<i64: 24, 256>}, {pipeline_mode = #tpu.pipeline_mode<synchronous>, transform_indices = @transform_1, window_bounds = array<i64: 256, 128>}, {pipeline_mode = #tpu.pipeline_mode<synchronous>, transform_indices = @transform_2, window_bounds = array<i64: 1, 128>}, {pipeline_mode = #tpu.pipeline_mode<synchronous>, transform_indices = @transform_3, window_bounds = array<i64: 128, 256>}, {pipeline_mode = #tpu.pipeline_mode<synchronous>, transform_indices = @transform_4, window_bounds = array<i64: 1, 256>}, {transform_indices = @transform_5, window_bounds = array<i64: 1, 1>}, {transform_indices = @transform_6, window_bounds = array<i64: 24, 256>}]} {
    %c0 = arith.constant 0 : index
    %c0_0 = arith.constant 0 : index
    %0 = vector.load %arg1[%c0, %c0_0] : memref<24x256xf32, #tpu.memory_space<vmem>>, vector<24x256xf32>
    %1 = arith.truncf %0 : vector<24x256xf32> to vector<24x256xbf16>
    %c0_1 = arith.constant 0 : index
    %c0_2 = arith.constant 0 : index
    %2 = vector.load %arg2[%c0_1, %c0_2] : memref<256x128xbf16, #tpu.memory_space<vmem>>, vector<256x128xbf16>
    %cst = arith.constant dense<0.000000e+00> : vector<24x128xf32>
    %3 = tpu.matmul %1, %2, %cst {dimension_numbers = #tpu.dot_dimension_numbers<[1], [0], [0], [1], [0, 0, 1, 1], [], []>} : vector<24x256xbf16>, vector<256x128xbf16>, vector<24x128xf32> -> vector<24x128xf32>
    %c0_3 = arith.constant 0 : index
    %c0_4 = arith.constant 0 : index
    %4 = vector.load %arg3[%c0_3, %c0_4] : memref<1x128xf32, #tpu.memory_space<vmem>>, vector<1x128xf32>
    %5 = vector.broadcast %4 : vector<1x128xf32> to vector<24x128xf32>
    %6 = arith.addf %3, %5 : vector<24x128xf32>
    %cst_5 = arith.constant 0.000000e+00 : f32
    %7 = vector.broadcast %cst_5 : f32 to vector<24x128xf32>
    %8 = arith.maximumf %6, %7 : vector<24x128xf32>
    %9 = arith.truncf %8 : vector<24x128xf32> to vector<24x128xbf16>
    %c0_6 = arith.constant 0 : index
    %c0_7 = arith.constant 0 : index
    %10 = vector.load %arg4[%c0_6, %c0_7] : memref<128x256xbf16, #tpu.memory_space<vmem>>, vector<128x256xbf16>
    %cst_8 = arith.constant dense<0.000000e+00> : vector<24x256xf32>
    %11 = tpu.matmul %9, %10, %cst_8 {dimension_numbers = #tpu.dot_dimension_numbers<[1], [0], [0], [1], [0, 0, 1, 1], [], []>} : vector<24x128xbf16>, vector<128x256xbf16>, vector<24x256xf32> -> vector<24x256xf32>
    %c0_9 = arith.constant 0 : index
    %c0_10 = arith.constant 0 : index
    %12 = vector.load %arg5[%c0_9, %c0_10] : memref<1x256xf32, #tpu.memory_space<vmem>>, vector<1x256xf32>
    %13 = vector.broadcast %12 : vector<1x256xf32> to vector<24x256xf32>
    %14 = arith.addf %11, %13 : vector<24x256xf32>
    %cst_11 = arith.constant 0.000000e+00 : f32
    %15 = vector.broadcast %cst_11 : f32 to vector<24x256xf32>
    %16 = arith.maximumf %14, %15 : vector<24x256xf32>
    %c0_12 = arith.constant 0 : index
    %c0_13 = arith.constant 0 : index
    %17 = memref.load %arg6[%c0_12, %c0_13] : memref<1x1xf32, #tpu.memory_space<smem>>
    %18 = arith.subf %16, %0 : vector<24x256xf32>
    %19 = vector.broadcast %17 : f32 to vector<24x256xf32>
    %20 = arith.mulf %19, %18 : vector<24x256xf32>
    %21 = arith.addf %0, %20 : vector<24x256xf32>
    %c0_14 = arith.constant 0 : index
    %c0_15 = arith.constant 0 : index
    %22 = vector.load %arg7[%c0_14, %c0_15] : memref<24x256xf32, #tpu.memory_space<vmem>>, vector<24x256xf32>
    tpu.vector_store %arg7[%c0_14, %c0_15], %21 {strides = array<i32>} : memref<24x256xf32, #tpu.memory_space<vmem>>, vector<24x256xf32>,
    return
  }
  func.func @transform_0(%arg0: i32) -> (i32, i32) {
    %c0_i32 = arith.constant 0 : i32
    %c0_i32_0 = arith.constant 0 : i32
    return %arg0, %c0_i32 : i32, i32
  }
  func.func @transform_1(%arg0: i32) -> (i32, i32) {
    %c0_i32 = arith.constant 0 : i32
    %c0_i32_0 = arith.constant 0 : i32
    %c0_i32_1 = arith.constant 0 : i32
    return %c0_i32, %c0_i32_0 : i32, i32
  }
  func.func @transform_2(%arg0: i32) -> (i32, i32) {
    %c0_i32 = arith.constant 0 : i32
    %c0_i32_0 = arith.constant 0 : i32
    %c0_i32_1 = arith.constant 0 : i32
    return %c0_i32, %c0_i32_0 : i32, i32
  }
  func.func @transform_3(%arg0: i32) -> (i32, i32) {
    %c0_i32 = arith.constant 0 : i32
    %c0_i32_0 = arith.constant 0 : i32
    %c0_i32_1 = arith.constant 0 : i32
    return %c0_i32, %c0_i32_0 : i32, i32
  }
  func.func @transform_4(%arg0: i32) -> (i32, i32) {
    %c0_i32 = arith.constant 0 : i32
    %c0_i32_0 = arith.constant 0 : i32
    %c0_i32_1 = arith.constant 0 : i32
    return %c0_i32, %c0_i32_0 : i32, i32
  }
  func.func @transform_5(%arg0: i32) -> (i32, i32) {
    %c0_i32 = arith.constant 0 : i32
    %c0_i32_0 = arith.constant 0 : i32
    %c0_i32_1 = arith.constant 0 : i32
    return %c0_i32, %c0_i32_0 : i32, i32
  }
  func.func @transform_6(%arg0: i32) -> (i32, i32) {
    %c0_i32 = arith.constant 0 : i32
    %c0_i32_0 = arith.constant 0 : i32
    return %arg0, %c0_i32 : i32, i32
  }
}

</mosaic_0001>

<llo_original>
// kernel: tpu_custom_call.1
$region0: #{tpu_custom_call.1}
  #allocation0 [shape = 'u32[]', space=smem, size = 0x4, offset = 0x4, fixed_abs, tag = 'smem constant byte address 0x4 - core index']
  #allocation1 [shape = 'u32[72,128]{1,0:T(1,128)}', space=vmem, size = 0x9000, scoped, tag = 'internal scratch']
  #allocation2 [shape = 'f32[1,1]{1,0:T(1,128)S(6)}', space=smem, size = 0x200, scoped, tag = 'scoped memory for tpu_custom_call.1']
  %s0 = inlined_call_operand.hbm [shape: f32[48,256], index: 0, kind: input, shape index: {}]
  %s1 = inlined_call_operand.hbm [shape: bf16[256,128], index: 1, kind: input, shape index: {}]
  %s2 = inlined_call_operand.vmem [shape: f32[1,128], index: 2, kind: input, shape index: {}]
  %s3 = inlined_call_operand.hbm [shape: bf16[128,256], index: 3, kind: input, shape index: {}]
  %s4 = inlined_call_operand.vmem [shape: f32[1,256], index: 4, kind: input, shape index: {}]
  %s5 = inlined_call_operand.<no memory space> [shape: f32[1,1], index: 5, kind: input, shape index: {}]
  %s6 = inlined_call_operand.hbm [shape: f32[48,256], index: 6, kind: output, shape index: {}]
  %s7 = sld [smem:[#allocation0]]
  $region69: #{tpu_custom_call.1} parent=0
    _
  %s9 = ssub.s32 1, %s7
  %s10 = scalar_select 0, %s9, %s7
  %11 = sst [smem:[#allocation2]] %s5
  $region1: #{tpu_custom_call.1} parent=0
    #allocation3 [shape = 'u8[49152]{0}', space=vmem, size = 0xc000, scoped, tag = 'input window, operand 0']
    #allocation4 [shape = 's32[2]{0}', space=sflag, size = 0x8, scoped, tag = 'scoped memory for tpu_custom_call.1']
    #allocation5 [shape = 's32[2]{0}', space=sflag, size = 0x8, scoped, tag = 'scoped memory for tpu_custom_call.1']
    #allocation6 [shape = 'u8[65536]{0}', space=vmem, size = 0x10000, scoped, tag = 'input window, operand 1, single buffered']
    #allocation7 [shape = 's32[1]{0}', space=sflag, size = 0x4, scoped, tag = 'scoped memory for tpu_custom_call.1']
    #allocation8 [shape = 'u8[65536]{0}', space=vmem, size = 0x10000, scoped, tag = 'input window, operand 3, single buffered']
    #allocation9 [shape = 'u8[49152]{0}', space=vmem, size = 0xc000, scoped, tag = 'output window, operand 0']
    %12 = vsyncpa [#allocation4], 0
    %s13 = scalar_lea.sflag [#allocation4], 1
    %14 = vsyncpa %s13, 0
    %15 = vsyncpa [#allocation7], 0
    %16 = vsyncpa [#allocation5], 0
    %s17 = scalar_lea.sflag [#allocation5], 1
    %18 = vsyncpa %s17, 0
    loop: start=0, step=1, limit=4
    $region2: #{tpu_custom_call.1} parent=1 // loop_pre_header
      _
    $region3: #{tpu_custom_call.1} parent=1 // loop_header
      %s20 = sphi 0, %s24
      %p21 = scmp.ge.s32.totalorder %s20, 4
      %s30 = sphi 0, %s32
      %s33 = sphi 0, %s30
      %s34 = sphi 0, %s33
      %s50 = sphi 0, %s34
      %s54 = sphi 0, %s54
      %s56 = sphi 0, %s54
      %s57 = sphi 0, %s56
      %s71 = sphi 0, %s57
      %s75 = sphi 0, %s75
      %s77 = sphi 0, %s75
      %s78 = sphi 0, %s77
      %s92 = sphi 0, %s78
      %s96 = sphi 0, %s96
      %s98 = sphi 0, %s96
      %s99 = sphi 0, %s98
      %s113 = sphi 0, %s99
      %s117 = sphi 0, %s117
      %s119 = sphi 0, %s117
      %s120 = sphi 0, %s119
      %s134 = sphi 0, %s120
      %s138 = sphi 0, %s138
      %s140 = sphi 0, %s138
      %s141 = sphi 0, %s140
      %s155 = sphi 0, %s141
      %s161 = sphi 0, %s163
      %s164 = sphi 0, %s161
      %s165 = sphi 0, %s164
      %s181 = sphi 0, %s165
    $region4: #{tpu_custom_call.1} parent=1 // loop_header_branch
      %23 = sbr.rel (%p21) target = $region8
    $region5: #{tpu_custom_call.1} parent=1 // loop_body
      %s25 = ssub.s32 %s20, 1
      %s26 = ssub.s32 %s20, 2
      %s27 = sadd.s32 %s20, 1
      %s28 = ssub.s32 %s20, %s27
      %p29 = scmp.eq.s32.totalorder %s28, 0
      %s31 = sadd.s32 %s30, 1
      %s32 = scalar_select %p29, %s30, %s31
      %p35 = pneg %p29
      %p36 = scmp.eq.s32.totalorder %s20, 1
      %p37 = por %p35, %p36
      %p38 = scmp.ne.s32.totalorder %s30, %s33
      %p39 = scmp.eq.s32.totalorder %s20, 0
      %p40 = por %p38, %p39
      %p41 = scmp.ne.s32.totalorder %s30, %s33
      %p42 = scmp.eq.s32.totalorder %s25, 1
      %p43 = por %p41, %p42
      %p44 = scmp.ne.s32.totalorder %s33, %s34
      %p45 = scmp.eq.s32.totalorder %s25, 0
      %p46 = por %p44, %p45
      %p47 = scmp.ne.s32.totalorder %s33, %s34
      %p48 = scmp.eq.s32.totalorder %s26, 1
      %p49 = por %p47, %p48
      %p51 = scmp.ne.s32.totalorder %s34, %s50
      %p52 = scmp.eq.s32.totalorder %s26, 0
      %p53 = por %p51, %p52
      %s55 = sadd.s32 %s54, 1
      %p58 = scmp.eq.s32.totalorder %s20, 1
      %p59 = scmp.ne.s32.totalorder %s54, %s56
      %p60 = scmp.eq.s32.totalorder %s20, 0
      %p61 = por %p59, %p60
      %p62 = scmp.ne.s32.totalorder %s54, %s56
      %p63 = scmp.eq.s32.totalorder %s25, 1
      %p64 = por %p62, %p63
      %p65 = scmp.ne.s32.totalorder %s56, %s57
      %p66 = scmp.eq.s32.totalorder %s25, 0
      %p67 = por %p65, %p66
      %p68 = scmp.ne.s32.totalorder %s56, %s57
      %p69 = scmp.eq.s32.totalorder %s26, 1
      %p70 = por %p68, %p69
      %p72 = scmp.ne.s32.totalorder %s57, %s71
      %p73 = scmp.eq.s32.totalorder %s26, 0
      %p74 = por %p72, %p73
      %s76 = sadd.s32 %s75, 1
      %p79 = scmp.eq.s32.totalorder %s20, 1
      %p80 = scmp.ne.s32.totalorder %s75, %s77
      %p81 = scmp.eq.s32.totalorder %s20, 0
      %p82 = por %p80, %p81
      %p83 = scmp.ne.s32.totalorder %s75, %s77
      %p84 = scmp.eq.s32.totalorder %s25, 1
      %p85 = por %p83, %p84
      %p86 = scmp.ne.s32.totalorder %s77, %s78
      %p87 = scmp.eq.s32.totalorder %s25, 0
      %p88 = por %p86, %p87
      %p89 = scmp.ne.s32.totalorder %s77, %s78
      %p90 = scmp.eq.s32.totalorder %s26, 1
      %p91 = por %p89, %p90
      %p93 = scmp.ne.s32.totalorder %s78, %s92
      %p94 = scmp.eq.s32.totalorder %s26, 0
      %p95 = por %p93, %p94
      %s97 = sadd.s32 %s96, 1
      %p100 = scmp.eq.s32.totalorder %s20, 1
      %p101 = scmp.ne.s32.totalorder %s96, %s98
      %p102 = scmp.eq.s32.totalorder %s20, 0
      %p103 = por %p101, %p102
      %p104 = scmp.ne.s32.totalorder %s96, %s98
      %p105 = scmp.eq.s32.totalorder %s25, 1
      %p106 = por %p104, %p105
      %p107 = scmp.ne.s32.totalorder %s98, %s99
      %p108 = scmp.eq.s32.totalorder %s25, 0
      %p109 = por %p107, %p108
      %p110 = scmp.ne.s32.totalorder %s98, %s99
      %p111 = scmp.eq.s32.totalorder %s26, 1
      %p112 = por %p110, %p111
      %p114 = scmp.ne.s32.totalorder %s99, %s113
      %p115 = scmp.eq.s32.totalorder %s26, 0
      %p116 = por %p114, %p115
      %s118 = sadd.s32 %s117, 1
      %p121 = scmp.eq.s32.totalorder %s20, 1
      %p122 = scmp.ne.s32.totalorder %s117, %s119
      %p123 = scmp.eq.s32.totalorder %s20, 0
      %p124 = por %p122, %p123
      %p125 = scmp.ne.s32.totalorder %s117, %s119
      %p126 = scmp.eq.s32.totalorder %s25, 1
      %p127 = por %p125, %p126
      %p128 = scmp.ne.s32.totalorder %s119, %s120
      %p129 = scmp.eq.s32.totalorder %s25, 0
      %p130 = por %p128, %p129
      %p131 = scmp.ne.s32.totalorder %s119, %s120
      %p132 = scmp.eq.s32.totalorder %s26, 1
      %p133 = por %p131, %p132
      %p135 = scmp.ne.s32.totalorder %s120, %s134
      %p136 = scmp.eq.s32.totalorder %s26, 0
      %p137 = por %p135, %p136
      %s139 = sadd.s32 %s138, 1
      %p142 = scmp.eq.s32.totalorder %s20, 1
      %p143 = scmp.ne.s32.totalorder %s138, %s140
      %p144 = scmp.eq.s32.totalorder %s20, 0
      %p145 = por %p143, %p144
      %p146 = scmp.ne.s32.totalorder %s138, %s140
      %p147 = scmp.eq.s32.totalorder %s25, 1
      %p148 = por %p146, %p147
      %p149 = scmp.ne.s32.totalorder %s140, %s141
      %p150 = scmp.eq.s32.totalorder %s25, 0
      %p151 = por %p149, %p150
      %p152 = scmp.ne.s32.totalorder %s140, %s141
      %p153 = scmp.eq.s32.totalorder %s26, 1
      %p154 = por %p152, %p153
      %p156 = scmp.ne.s32.totalorder %s141, %s155
      %p157 = scmp.eq.s32.totalorder %s26, 0
      %p158 = por %p156, %p157
      %s159 = ssub.s32 %s20, %s27
      %p160 = scmp.eq.s32.totalorder %s159, 0
      %s162 = sadd.s32 %s161, 1
      %s163 = scalar_select %p160, %s161, %s162
      %p166 = pneg %p160
      %p167 = scmp.eq.s32.totalorder %s20, 1
      %p168 = por %p166, %p167
      %p169 = scmp.ne.s32.totalorder %s161, %s164
      %p170 = scmp.eq.s32.totalorder %s20, 0
      %p171 = por %p169, %p170
      %p172 = scmp.ne.s32.totalorder %s161, %s164
      %p173 = scmp.eq.s32.totalorder %s25, 1
      %p174 = por %p172, %p173
      %p175 = scmp.ne.s32.totalorder %s164, %s165
      %p176 = scmp.eq.s32.totalorder %s25, 0
      %p177 = por %p175, %p176
      %p178 = scmp.ne.s32.totalorder %s164, %s165
      %p179 = scmp.eq.s32.totalorder %s26, 1
      %p180 = por %p178, %p179
      %p182 = scmp.ne.s32.totalorder %s165, %s181
      %p183 = scmp.eq.s32.totalorder %s26, 0
      %p184 = por %p182, %p183
      %p185 = scmp.le.s32.totalorder 1, %s20
      %p186 = scmp.lt.s32.totalorder %s20, 3
      %p187 = pnand %p185, %p186
      %p188 = pneg %p187
      // Predicated region
      $region9: #{tpu_custom_call.1} parent=5 // pred_check
        _
      $region10: #{tpu_custom_call.1} parent=5 // pred_check_branch
        %190 = sbr.rel (%p187) target = $region12
      $region11: #{tpu_custom_call.1} parent=5 // pred_region
        %s191 = ssub.s32 %s20, 1
        // Predicated region
        $region13: #{tpu_custom_call.1} parent=11 // pred_check
          %p192 = pneg %p67
        $region14: #{tpu_custom_call.1} parent=11 // pred_check_branch
          %194 = sbr.rel (%p192) target = $region16
        $region15: #{tpu_custom_call.1} parent=11 // pred_region
          %196 = vsyncadd [#allocation7], 0
          %s197 = sshll.u32 %s1, 4
          %s198 = int_to_ptr.hbm [resolvable:$true] %s197
          %s199 = sshll.u32 [#allocation6], 4
          %s200 = int_to_ptr.vmem [resolvable:$true] %s199
          %205 = dma.hbm_to_vmem [thread:$0]  %s198, 2048, %s200, [#allocation7], 64, 64, 4
        $region16: #{tpu_custom_call.1} parent=11 // pred_fallthru
          _
        // Predicated region
        $region17: #{tpu_custom_call.1} parent=11 // pred_check
          %p206 = pneg %p88
        $region18: #{tpu_custom_call.1} parent=11 // pred_check_branch
          %208 = sbr.rel (%p206) target = $region20
        $region19: #{tpu_custom_call.1} parent=11 // pred_region
          _
        $region20: #{tpu_custom_call.1} parent=11 // pred_fallthru
          _
        // Predicated region
        $region21: #{tpu_custom_call.1} parent=11 // pred_check
          %p209 = pneg %p109
        $region22: #{tpu_custom_call.1} parent=11 // pred_check_branch
          %211 = sbr.rel (%p209) target = $region24
        $region23: #{tpu_custom_call.1} parent=11 // pred_region
          %213 = vsyncadd [#allocation7], 0
          %s214 = sshll.u32 %s3, 4
          %s215 = int_to_ptr.hbm [resolvable:$true] %s214
          %s216 = sshll.u32 [#allocation8], 4
          %s217 = int_to_ptr.vmem [resolvable:$true] %s216
          %222 = dma.hbm_to_vmem [thread:$0]  %s215, 2048, %s217, [#allocation7], 128, 128, 8
        $region24: #{tpu_custom_call.1} parent=11 // pred_fallthru
          _
        // Predicated region
        $region25: #{tpu_custom_call.1} parent=11 // pred_check
          %p223 = pneg %p130
        $region26: #{tpu_custom_call.1} parent=11 // pred_check_branch
          %225 = sbr.rel (%p223) target = $region28
        $region27: #{tpu_custom_call.1} parent=11 // pred_region
          _
        $region28: #{tpu_custom_call.1} parent=11 // pred_fallthru
          _
        // Predicated region
        $region29: #{tpu_custom_call.1} parent=11 // pred_check
          %p226 = pneg %p151
        $region30: #{tpu_custom_call.1} parent=11 // pred_check_branch
          %228 = sbr.rel (%p226) target = $region32
        $region31: #{tpu_custom_call.1} parent=11 // pred_region
          _
        $region32: #{tpu_custom_call.1} parent=11 // pred_fallthru
          _
      $region12: #{tpu_custom_call.1} parent=5 // pred_fallthru
        _
      %p229 = scmp.lt.s32.totalorder %s20, 2
      // Predicated region
      $region33: #{tpu_custom_call.1} parent=5 // pred_check
        %p230 = pneg %p229
      $region34: #{tpu_custom_call.1} parent=5 // pred_check_branch
        %232 = sbr.rel (%p230) target = $region36
      $region35: #{tpu_custom_call.1} parent=5 // pred_region
        // Predicated region
        $region37: #{tpu_custom_call.1} parent=35 // pred_check
          %p233 = pneg %p40
        $region38: #{tpu_custom_call.1} parent=35 // pred_check_branch
          %235 = sbr.rel (%p233) target = $region40
        $region39: #{tpu_custom_call.1} parent=35 // pred_region
          %s236 = sand.u32 %s30, 1
          %s237 = scalar_lea.sflag [#allocation4], %s236
          %s238 = sand.u32 %s30, 1
          %s239 = smul.addr %s238, 48
          %s240 = scalar_lea.vmem [#allocation3], %s239
          %s241 = smul.u32 3, %s20
          %243 = vsyncadd %s237, 0
          %s244 = smul.addr %s241, 2
          %s245 = smul.addr %s244, 8
          %s246 = scalar_lea.hbm %s0, %s245
          %s247 = sshll.u32 %s246, 4
          %s248 = int_to_ptr.hbm [resolvable:$true] %s247
          %s249 = sshll.u32 %s240, 4
          %s250 = int_to_ptr.vmem [resolvable:$true] %s249
          %255 = dma.hbm_to_vmem [thread:$0]  %s248, 768, %s250, %s237, 256, 256, 16
        $region40: #{tpu_custom_call.1} parent=35 // pred_fallthru
          _
      $region36: #{tpu_custom_call.1} parent=5 // pred_fallthru
        _
      %p256 = scmp.le.s32.totalorder 1, %s20
      %p257 = scmp.lt.s32.totalorder %s20, 3
      %p258 = pnand %p256, %p257
      %p259 = pneg %p258
      // Predicated region
      $region41: #{tpu_custom_call.1} parent=5 // pred_check
        _
      $region42: #{tpu_custom_call.1} parent=5 // pred_check_branch
        %261 = sbr.rel (%p258) target = $region44
      $region43: #{tpu_custom_call.1} parent=5 // pred_region
        %s262 = ssub.s32 %s20, 1
        %s263 = sand.u32 %s33, 1
        %s264 = scalar_lea.sflag [#allocation4], %s263
        %s265 = sand.u32 %s33, 1
        %s266 = smul.addr %s265, 48
        %s267 = scalar_lea.vmem [#allocation3], %s266
        // Predicated region
        $region45: #{tpu_custom_call.1} parent=43 // pred_check
          %p268 = pneg %p46
        $region46: #{tpu_custom_call.1} parent=43 // pred_check_branch
          %270 = sbr.rel (%p268) target = $region48
        $region47: #{tpu_custom_call.1} parent=43 // pred_region
          %272 = dma.done %s264, 768
        $region48: #{tpu_custom_call.1} parent=43 // pred_fallthru
          _
        // Predicated region
        $region49: #{tpu_custom_call.1} parent=43 // pred_check
          %p273 = pneg %p67
        $region50: #{tpu_custom_call.1} parent=43 // pred_check_branch
          %275 = sbr.rel (%p273) target = $region52
        $region51: #{tpu_custom_call.1} parent=43 // pred_region
          %277 = dma.done [#allocation7], 2048
        $region52: #{tpu_custom_call.1} parent=43 // pred_fallthru
          _
        // Predicated region
        $region53: #{tpu_custom_call.1} parent=43 // pred_check
          %p278 = pneg %p109
        $region54: #{tpu_custom_call.1} parent=43 // pred_check_branch
          %280 = sbr.rel (%p278) target = $region56
        $region55: #{tpu_custom_call.1} parent=43 // pred_region
          %282 = dma.done [#allocation7], 2048
        $region56: #{tpu_custom_call.1} parent=43 // pred_fallthru
          _
        %s283 = sand.u32 %s33, 1
        %s284 = scalar_lea.sflag [#allocation4], %s283
        %s285 = sand.u32 %s33, 1
        %s286 = smul.addr %s285, 48
        %s287 = scalar_lea.vmem [#allocation3], %s286
        %p288 = pneg %p46
        %p289 = pneg %p43
        %p290 = pneg %p67
        %p291 = pneg %p64
        %p292 = pneg %p88
        %p293 = pneg %p85
        %p294 = pneg %p109
        %p295 = pneg %p106
        %p296 = pneg %p130
        %p297 = pneg %p127
        %p298 = pneg %p151
        %p299 = pneg %p148
        %p300 = pneg %p177
        %p301 = pneg %p174
        %s302 = sand.u32 %s164, 1
        %s303 = scalar_lea.sflag [#allocation5], %s302
        %s304 = sand.u32 %s164, 1
        %s305 = smul.addr %s304, 48
        %s306 = scalar_lea.vmem [#allocation9], %s305
        %s307 = smul.u32 3, %s25
        %s308 = smul.u32 3, %s25
        %v309 = vld [vmem:[%s267] sm:$0xff]
        %v310 = vld [vmem:[%s267 + $0x8] sm:$0xff]
        %v311 = vld [vmem:[%s267 + $0x10] sm:$0xff]
        %v312 = vld [vmem:[%s267 + $0x18] sm:$0xff]
        %v313 = vld [vmem:[%s267 + $0x20] sm:$0xff]
        %v314 = vld [vmem:[%s267 + $0x28] sm:$0xff]
        %v315 = vpack.c.bf16 %v311, %v309
        %v316 = vpack.c.bf16 %v312, %v310
        %v317 = vpack.c.bf16 %v313, %v313
        %v318 = vpack.c.bf16 %v314, %v314
        %v319 = vld [vmem:[#allocation6] sm:$0xf]
        %v320 = vld [vmem:[#allocation6 + $0x4] sm:$0xf]
        %v321 = vld [vmem:[#allocation6 + $0x8] sm:$0xf]
        %v322 = vld [vmem:[#allocation6 + $0xc] sm:$0xf]
        %v323 = vld [vmem:[#allocation6 + $0x10] sm:$0xf]
        %v324 = vld [vmem:[#allocation6 + $0x14] sm:$0xf]
        %v325 = vld [vmem:[#allocation6 + $0x18] sm:$0xf]
        %v326 = vld [vmem:[#allocation6 + $0x1c] sm:$0xf]
        %v327 = vld [vmem:[#allocation6 + $0x20] sm:$0xf]
        %v328 = vld [vmem:[#allocation6 + $0x24] sm:$0xf]
        %v329 = vld [vmem:[#allocation6 + $0x28] sm:$0xf]
        %v330 = vld [vmem:[#allocation6 + $0x2c] sm:$0xf]
        %v331 = vld [vmem:[#allocation6 + $0x30] sm:$0xf]
        %v332 = vld [vmem:[#allocation6 + $0x34] sm:$0xf]
        %v333 = vld [vmem:[#allocation6 + $0x38] sm:$0xf]
        %v334 = vld [vmem:[#allocation6 + $0x3c] sm:$0xf]
        %v335 = vld [vmem:[#allocation6 + $0x40] sm:$0xf]
        %v336 = vld [vmem:[#allocation6 + $0x44] sm:$0xf]
        %v337 = vld [vmem:[#allocation6 + $0x48] sm:$0xf]
        %v338 = vld [vmem:[#allocation6 + $0x4c] sm:$0xf]
        %v339 = vld [vmem:[#allocation6 + $0x50] sm:$0xf]
        %v340 = vld [vmem:[#allocation6 + $0x54] sm:$0xf]
        %v341 = vld [vmem:[#allocation6 + $0x58] sm:$0xf]
        %v342 = vld [vmem:[#allocation6 + $0x5c] sm:$0xf]
        %v343 = vld [vmem:[#allocation6 + $0x60] sm:$0xf]
        %v344 = vld [vmem:[#allocation6 + $0x64] sm:$0xf]
        %v345 = vld [vmem:[#allocation6 + $0x68] sm:$0xf]
        %v346 = vld [vmem:[#allocation6 + $0x6c] sm:$0xf]
        %v347 = vld [vmem:[#allocation6 + $0x70] sm:$0xf]
        %v348 = vld [vmem:[#allocation6 + $0x74] sm:$0xf]
        %v349 = vld [vmem:[#allocation6 + $0x78] sm:$0xf]
        %v350 = vld [vmem:[#allocation6 + $0x7c] sm:$0xf]
        %v351 = vld [vmem:[%s2] sm:$0x1]
        %v353 = vperm.slane %v351, 0
        %v387 = vunpack.c.l.b16 %v319
        %v388 = vunpack.c.l.b16 %v320
        %v389 = vunpack.c.l.b16 %v321
        %v390 = vunpack.c.l.b16 %v322
        %v391 = vunpack.c.l.b16 %v323
        %v392 = vunpack.c.l.b16 %v324
        %v393 = vunpack.c.l.b16 %v325
        %v394 = vunpack.c.l.b16 %v326
        %v395 = vunpack.c.l.b16 %v327
        %v396 = vunpack.c.l.b16 %v328
        %v397 = vunpack.c.l.b16 %v329
        %v398 = vunpack.c.l.b16 %v330
        %v399 = vunpack.c.l.b16 %v331
        %v400 = vunpack.c.l.b16 %v332
        %v401 = vunpack.c.l.b16 %v333
        %v402 = vunpack.c.l.b16 %v334
        %v403 = vunpack.c.l.b16 %v335
        %v404 = vunpack.c.l.b16 %v336
        %v405 = vunpack.c.l.b16 %v337
        %v406 = vunpack.c.l.b16 %v338
        %v407 = vunpack.c.l.b16 %v339
        %v408 = vunpack.c.l.b16 %v340
        %v409 = vunpack.c.l.b16 %v341
        %v410 = vunpack.c.l.b16 %v342
        %v411 = vunpack.c.l.b16 %v343
        %v412 = vunpack.c.l.b16 %v344
        %v413 = vunpack.c.l.b16 %v345
        %v414 = vunpack.c.l.b16 %v346
        %v415 = vunpack.c.l.b16 %v347
        %v416 = vunpack.c.l.b16 %v348
        %v417 = vunpack.c.l.b16 %v349
        %v418 = vunpack.c.l.b16 %v350
        %v419 = vpack.c.b16 %v388, %v387
        %v420 = vpack.c.b16 %v390, %v389
        %v421 = vpack.c.b16 %v392, %v391
        %v422 = vpack.c.b16 %v394, %v393
        %v423 = vpack.c.b16 %v396, %v395
        %v424 = vpack.c.b16 %v398, %v397
        %v425 = vpack.c.b16 %v400, %v399
        %v426 = vpack.c.b16 %v402, %v401
        %v427 = vpack.c.b16 %v404, %v403
        %v428 = vpack.c.b16 %v406, %v405
        %v429 = vpack.c.b16 %v408, %v407
        %v430 = vpack.c.b16 %v410, %v409
        %v431 = vpack.c.b16 %v412, %v411
        %v432 = vpack.c.b16 %v414, %v413
        %v433 = vpack.c.b16 %v416, %v415
        %v434 = vpack.c.b16 %v418, %v417
        %451 = vmatpush.bf16.msra.mxu0 %v426
        %452 = vmatpush.bf16.msra.mxu0 %v425
        %453 = vmatpush.bf16.msra.mxu0 %v424
        %454 = vmatpush.bf16.msra.mxu0 %v423
        %455 = vmatpush.bf16.msra.mxu0 %v422
        %456 = vmatpush.bf16.msra.mxu0 %v421
        %457 = vmatpush.bf16.msra.mxu0 %v420
        %458 = vmatpush.bf16.msra.mxu0 %v419
        %459 = vmatmul.bf16.gmra.mxu0 %v315
        %v460 = vpop.f32.mrf.mxu0
        %v461 = vadd.f32 %v353, %v460
        %v462 = vpop.f32.mrf.mxu0
        %v463 = vadd.f32 %v353, %v462
        %464 = vmatmul.bf16.gmra.mxu0 %v317
        %v465 = vpop.f32.mrf.mxu0
        %v466 = vadd.f32 %v353, %v465
        %v467 = vpop.f32.mrf.mxu0
        %468 = vdwg.mxu0
        %469 = vmatpush.bf16.msra.mxu0 %v434
        %470 = vmatpush.bf16.msra.mxu0 %v433
        %471 = vmatpush.bf16.msra.mxu0 %v432
        %472 = vmatpush.bf16.msra.mxu0 %v431
        %473 = vmatpush.bf16.msra.mxu0 %v430
        %474 = vmatpush.bf16.msra.mxu0 %v429
        %475 = vmatpush.bf16.msra.mxu0 %v428
        %476 = vmatpush.bf16.msra.mxu0 %v427
        %477 = vmatmul.bf16.gmra.mxu0 %v316
        %v478 = vpop.f32.mrf.mxu0
        %v479 = vadd.f32 %v461, %v478
        %v480 = vpop.f32.mrf.mxu0
        %v481 = vadd.f32 %v463, %v480
        %482 = vmatmul.bf16.gmra.mxu0 %v318
        %v483 = vpop.f32.mrf.mxu0
        %v484 = vadd.f32 %v466, %v483
        %v485 = vpop.f32.mrf.mxu0
        %486 = vdwg.mxu0
        %v487 = vmax.f32 %v479, 0.0
        %v488 = vmax.f32 %v481, 0.0
        %v489 = vmax.f32 %v484, 0.0
        %v490 = vpack.c.bf16 %v488, %v487
        %v491 = vpack.c.bf16 %v489, %v489
        %v492 = vld [vmem:[#allocation8] sm:$0xff]
        %v493 = vld [vmem:[#allocation8 + $0x8] sm:$0xff]
        %v494 = vld [vmem:[#allocation8 + $0x10] sm:$0xff]
        %v495 = vld [vmem:[#allocation8 + $0x18] sm:$0xff]
        %v496 = vld [vmem:[#allocation8 + $0x20] sm:$0xff]
        %v497 = vld [vmem:[#allocation8 + $0x28] sm:$0xff]
        %v498 = vld [vmem:[#allocation8 + $0x30] sm:$0xff]
        %v499 = vld [vmem:[#allocation8 + $0x38] sm:$0xff]
        %v500 = vld [vmem:[#allocation8 + $0x40] sm:$0xff]
        %v501 = vld [vmem:[#allocation8 + $0x48] sm:$0xff]
        %v502 = vld [vmem:[#allocation8 + $0x50] sm:$0xff]
        %v503 = vld [vmem:[#allocation8 + $0x58] sm:$0xff]
        %v504 = vld [vmem:[#allocation8 + $0x60] sm:$0xff]
        %v505 = vld [vmem:[#allocation8 + $0x68] sm:$0xff]
        %v506 = vld [vmem:[#allocation8 + $0x70] sm:$0xff]
        %v507 = vld [vmem:[#allocation8 + $0x78] sm:$0xff]
        %v508 = vld [vmem:[%s4] sm:$0x3]
        %v510 = vperm.slane %v508, 0
        %v511 = vperm.slane %v508, 1
        %v530 = vunpack.c.l.b16 %v492
        %v531 = vunpack.c.h.b16 %v492
        %v532 = vunpack.c.l.b16 %v493
        %v533 = vunpack.c.h.b16 %v493
        %v534 = vunpack.c.l.b16 %v494
        %v535 = vunpack.c.h.b16 %v494
        %v536 = vunpack.c.l.b16 %v495
        %v537 = vunpack.c.h.b16 %v495
        %v538 = vunpack.c.l.b16 %v496
        %v539 = vunpack.c.h.b16 %v496
        %v540 = vunpack.c.l.b16 %v497
        %v541 = vunpack.c.h.b16 %v497
        %v542 = vunpack.c.l.b16 %v498
        %v543 = vunpack.c.h.b16 %v498
        %v544 = vunpack.c.l.b16 %v499
        %v545 = vunpack.c.h.b16 %v499
        %v546 = vunpack.c.l.b16 %v500
        %v547 = vunpack.c.h.b16 %v500
        %v548 = vunpack.c.l.b16 %v501
        %v549 = vunpack.c.h.b16 %v501
        %v550 = vunpack.c.l.b16 %v502
        %v551 = vunpack.c.h.b16 %v502
        %v552 = vunpack.c.l.b16 %v503
        %v553 = vunpack.c.h.b16 %v503
        %v554 = vunpack.c.l.b16 %v504
        %v555 = vunpack.c.h.b16 %v504
        %v556 = vunpack.c.l.b16 %v505
        %v557 = vunpack.c.h.b16 %v505
        %v558 = vunpack.c.l.b16 %v506
        %v559 = vunpack.c.h.b16 %v506
        %v560 = vunpack.c.l.b16 %v507
        %v561 = vunpack.c.h.b16 %v507
        %v562 = vpack.c.b16 %v532, %v530
        %v563 = vpack.c.b16 %v533, %v531
        %v564 = vpack.c.b16 %v536, %v534
        %v565 = vpack.c.b16 %v537, %v535
        %v566 = vpack.c.b16 %v540, %v538
        %v567 = vpack.c.b16 %v541, %v539
        %v568 = vpack.c.b16 %v544, %v542
        %v569 = vpack.c.b16 %v545, %v543
        %v570 = vpack.c.b16 %v548, %v546
        %v571 = vpack.c.b16 %v549, %v547
        %v572 = vpack.c.b16 %v552, %v550
        %v573 = vpack.c.b16 %v553, %v551
        %v574 = vpack.c.b16 %v556, %v554
        %v575 = vpack.c.b16 %v557, %v555
        %v576 = vpack.c.b16 %v560, %v558
        %v577 = vpack.c.b16 %v561, %v559
        %594 = vmatpush.bf16.msra.mxu0 %v576
        %595 = vmatpush.bf16.msra.mxu0 %v574
        %596 = vmatpush.bf16.msra.mxu0 %v572
        %597 = vmatpush.bf16.msra.mxu0 %v570
        %598 = vmatpush.bf16.msra.mxu0 %v568
        %599 = vmatpush.bf16.msra.mxu0 %v566
        %600 = vmatpush.bf16.msra.mxu0 %v564
        %601 = vmatpush.bf16.msra.mxu0 %v562
        %602 = vmatmul.bf16.gmra.mxu0 %v490
        %v603 = vpop.f32.mrf.mxu0
        %v604 = vadd.f32 %v510, %v603
        %v605 = vpop.f32.mrf.mxu0
        %v606 = vadd.f32 %v510, %v605
        %607 = vmatmul.bf16.gmra.mxu0 %v491
        %v608 = vpop.f32.mrf.mxu0
        %v609 = vadd.f32 %v510, %v608
        %v610 = vpop.f32.mrf.mxu0
        %611 = vdwg.mxu0
        %612 = vmatpush.bf16.msra.mxu0 %v577
        %613 = vmatpush.bf16.msra.mxu0 %v575
        %614 = vmatpush.bf16.msra.mxu0 %v573
        %615 = vmatpush.bf16.msra.mxu0 %v571
        %616 = vmatpush.bf16.msra.mxu0 %v569
        %617 = vmatpush.bf16.msra.mxu0 %v567
        %618 = vmatpush.bf16.msra.mxu0 %v565
        %619 = vmatpush.bf16.msra.mxu0 %v563
        %620 = vmatmul.bf16.gmra.mxu0 %v490
        %v621 = vpop.f32.mrf.mxu0
        %v622 = vadd.f32 %v511, %v621
        %v623 = vpop.f32.mrf.mxu0
        %v624 = vadd.f32 %v511, %v623
        %625 = vmatmul.bf16.gmra.mxu0 %v491
        %v626 = vpop.f32.mrf.mxu0
        %v627 = vadd.f32 %v511, %v626
        %v628 = vpop.f32.mrf.mxu0
        %629 = vdwg.mxu0
        %v630 = vmax.f32 %v604, 0.0
        %v631 = vmax.f32 %v622, 0.0
        %v632 = vmax.f32 %v606, 0.0
        %v633 = vmax.f32 %v624, 0.0
        %v634 = vmax.f32 %v609, 0.0
        %v635 = vmax.f32 %v627, 0.0
        %s636 = sld [smem:[#allocation2]]
        %v637 = vsub.f32 %v630, %v309
        %v638 = vsub.f32 %v631, %v310
        %v639 = vsub.f32 %v632, %v311
        %v640 = vsub.f32 %v633, %v312
        %v641 = vsub.f32 %v634, %v313
        %v642 = vsub.f32 %v635, %v314
        %v643 = vstv %s636
        %v644 = vmul.f32 %v643, %v637
        %v645 = vmul.f32 %v643, %v638
        %v646 = vmul.f32 %v643, %v639
        %v647 = vmul.f32 %v643, %v640
        %v648 = vmul.f32 %v643, %v641
        %v649 = vmul.f32 %v643, %v642
        %v650 = vadd.f32 %v309, %v644
        %v651 = vadd.f32 %v310, %v645
        %v652 = vadd.f32 %v311, %v646
        %v653 = vadd.f32 %v312, %v647
        %v654 = vadd.f32 %v313, %v648
        %v655 = vadd.f32 %v314, %v649
        %656 = vst [vmem:[%s306] sm:$0xff] %v650
        %657 = vst [vmem:[%s306 + $0x8] sm:$0xff] %v651
        %658 = vst [vmem:[%s306 + $0x10] sm:$0xff] %v652
        %659 = vst [vmem:[%s306 + $0x18] sm:$0xff] %v653
        %660 = vst [vmem:[%s306 + $0x20] sm:$0xff] %v654
        %661 = vst [vmem:[%s306 + $0x28] sm:$0xff] %v655
        %s662 = sand.u32 %s164, 1
        %s663 = scalar_lea.sflag [#allocation5], %s662
        %s664 = sand.u32 %s164, 1
        %s665 = smul.addr %s664, 48
        %s666 = scalar_lea.vmem [#allocation9], %s665
        // Predicated region
        $region57: #{tpu_custom_call.1} parent=43 // pred_check
          %p667 = pneg %p174
        $region58: #{tpu_custom_call.1} parent=43 // pred_check_branch
          %669 = sbr.rel (%p667) target = $region60
        $region59: #{tpu_custom_call.1} parent=43 // pred_region
          %s670 = smul.u32 3, %s25
          %672 = vsyncadd %s663, 0
          %s673 = smul.addr %s670, 2
          %s674 = smul.addr %s673, 8
          %s675 = scalar_lea.hbm %s6, %s674
          %s676 = sshll.u32 %s666, 4
          %s677 = int_to_ptr.vmem [resolvable:$true] %s676
          %s678 = sshll.u32 %s675, 4
          %s679 = int_to_ptr.hbm [resolvable:$true] %s678
          %684 = dma.vmem_to_hbm [thread:$0]  %s677, 768, %s679, %s663, 256, 256, 16
        $region60: #{tpu_custom_call.1} parent=43 // pred_fallthru
          _
      $region44: #{tpu_custom_call.1} parent=5 // pred_fallthru
        _
      %p685 = scmp.le.s32.totalorder 2, %s20
      // Predicated region
      $region61: #{tpu_custom_call.1} parent=5 // pred_check
        %p686 = pneg %p685
      $region62: #{tpu_custom_call.1} parent=5 // pred_check_branch
        %688 = sbr.rel (%p686) target = $region64
      $region63: #{tpu_custom_call.1} parent=5 // pred_region
        %s689 = ssub.s32 %s20, 2
        // Predicated region
        $region65: #{tpu_custom_call.1} parent=63 // pred_check
          %p690 = pneg %p180
        $region66: #{tpu_custom_call.1} parent=63 // pred_check_branch
          %692 = sbr.rel (%p690) target = $region68
        $region67: #{tpu_custom_call.1} parent=63 // pred_region
          %s693 = sand.u32 %s165, 1
          %s694 = scalar_lea.sflag [#allocation5], %s693
          %s695 = sand.u32 %s165, 1
          %s696 = smul.addr %s695, 48
          %s697 = scalar_lea.vmem [#allocation9], %s696
          %699 = dma.done %s694, 768
        $region68: #{tpu_custom_call.1} parent=63 // pred_fallthru
          _
      $region64: #{tpu_custom_call.1} parent=5 // pred_fallthru
        _
    $region6: #{tpu_custom_call.1} parent=1 // loop_footer
      %s24 = sadd.s32 1, %s20
    $region7: #{tpu_custom_call.1} parent=1 // loop_footer_branch
      %19 = sbr.rel target = $region3
    $region8: #{tpu_custom_call.1} parent=1 // loop_exit
      _
    %700 = vsyncpa [#allocation4], 1
    %s701 = scalar_lea.sflag [#allocation4], 1
    %702 = vsyncpa %s701, 1
    %703 = vsyncpa [#allocation7], 1
    %704 = vsyncpa [#allocation5], 1
    %s705 = scalar_lea.sflag [#allocation5], 1
    %706 = vsyncpa %s705, 1

// kernel: tpu_custom_call.1
$region0: #{tpu_custom_call.1}
  #allocation0 [shape = 'u32[]', space=smem, size = 0x4, offset = 0x4, fixed_abs, tag = 'smem constant byte address 0x4 - core index']
  #allocation1 [shape = 'u32[72,128]{1,0:T(1,128)}', space=vmem, size = 0x9000, scoped, tag = 'internal scratch']
  #allocation2 [shape = 'f32[1,1]{1,0:T(1,128)S(6)}', space=smem, size = 0x200, scoped, tag = 'scoped memory for tpu_custom_call.1']
  %s0 = inlined_call_operand.hbm [shape: f32[48,256], index: 0, kind: input, shape index: {}]
  %s1 = inlined_call_operand.hbm [shape: bf16[256,128], index: 1, kind: input, shape index: {}]
  %s2 = inlined_call_operand.vmem [shape: f32[1,128], index: 2, kind: input, shape index: {}]
  %s3 = inlined_call_operand.hbm [shape: bf16[128,256], index: 3, kind: input, shape index: {}]
  %s4 = inlined_call_operand.vmem [shape: f32[1,256], index: 4, kind: input, shape index: {}]
  %s5 = inlined_call_operand.<no memory space> [shape: f32[1,1], index: 5, kind: input, shape index: {}]
  %s6 = inlined_call_operand.hbm [shape: f32[48,256], index: 6, kind: output, shape index: {}]
  %s7 = sld [smem:[#allocation0]]
  $region69: #{tpu_custom_call.1} parent=0
    _
  %s9 = ssub.s32 1, %s7
  %s10 = scalar_select 0, %s9, %s7
  %11 = sst [smem:[#allocation2]] %s5
  $region1: #{tpu_custom_call.1} parent=0
    #allocation3 [shape = 'u8[49152]{0}', space=vmem, size = 0xc000, scoped, tag = 'input window, operand 0']
    #allocation4 [shape = 's32[2]{0}', space=sflag, size = 0x8, scoped, tag = 'scoped memory for tpu_custom_call.1']
    #allocation5 [shape = 's32[2]{0}', space=sflag, size = 0x8, scoped, tag = 'scoped memory for tpu_custom_call.1']
    #allocation6 [shape = 'u8[65536]{0}', space=vmem, size = 0x10000, scoped, tag = 'input window, operand 1, single buffered']
    #allocation7 [shape = 's32[1]{0}', space=sflag, size = 0x4, scoped, tag = 'scoped memory for tpu_custom_call.1']
    #allocation8 [shape = 'u8[65536]{0}', space=vmem, size = 0x10000, scoped, tag = 'input window, operand 3, single buffered']
    #allocation9 [shape = 'u8[49152]{0}', space=vmem, size = 0xc000, scoped, tag = 'output window, operand 0']
    %12 = vsyncpa [#allocation4], 0
    %s13 = scalar_lea.sflag [#allocation4], 1
    %14 = vsyncpa %s13, 0
    %15 = vsyncpa [#allocation7], 0
    %16 = vsyncpa [#allocation5], 0
    %s17 = scalar_lea.sflag [#allocation5], 1
    %18 = vsyncpa %s17, 0
    loop: start=0, step=1, limit=4
    $region2: #{tpu_custom_call.1} parent=1 // loop_pre_header
      _
    $region3: #{tpu_custom_call.1} parent=1 // loop_header
      %s20 = sphi 0, %s24
      %p21 = scmp.ge.s32.totalorder %s20, 4
      %s30 = sphi 0, %s32
      %s33 = sphi 0, %s30
      %s34 = sphi 0, %s33
      %s50 = sphi 0, %s34
      %s54 = sphi 0, %s54
      %s56 = sphi 0, %s54
      %s57 = sphi 0, %s56
      %s71 = sphi 0, %s57
      %s75 = sphi 0, %s75
      %s77 = sphi 0, %s75
      %s78 = sphi 0, %s77
      %s92 = sphi 0, %s78
      %s96 = sphi 0, %s96
      %s98 = sphi 0, %s96
      %s99 = sphi 0, %s98
      %s113 = sphi 0, %s99
      %s117 = sphi 0, %s117
      %s119 = sphi 0, %s117
      %s120 = sphi 0, %s119
      %s134 = sphi 0, %s120
      %s138 = sphi 0, %s138
      %s140 = sphi 0, %s138
      %s141 = sphi 0, %s140
      %s155 = sphi 0, %s141
      %s161 = sphi 0, %s163
      %s164 = sphi 0, %s161
      %s165 = sphi 0, %s164
      %s181 = sphi 0, %s165
    $region4: #{tpu_custom_call.1} parent=1 // loop_header_branch
      %23 = sbr.rel (%p21) target = $region8
    $region5: #{tpu_custom_call.1} parent=1 // loop_body
      %s25 = ssub.s32 %s20, 1
      %s26 = ssub.s32 %s20, 2
      %s27 = sadd.s32 %s20, 1
      %s28 = ssub.s32 %s20, %s27
      %p29 = scmp.eq.s32.totalorder %s28, 0
      %s31 = sadd.s32 %s30, 1
      %s32 = scalar_select %p29, %s30, %s31
      %p35 = pneg %p29
      %p36 = scmp.eq.s32.totalorder %s20, 1
      %p37 = por %p35, %p36
      %p38 = scmp.ne.s32.totalorder %s30, %s33
      %p39 = scmp.eq.s32.totalorder %s20, 0
      %p40 = por %p38, %p39
      %p41 = scmp.ne.s32.totalorder %s30, %s33
      %p42 = scmp.eq.s32.totalorder %s25, 1
      %p43 = por %p41, %p42
      %p44 = scmp.ne.s32.totalorder %s33, %s34
      %p45 = scmp.eq.s32.totalorder %s25, 0
      %p46 = por %p44, %p45
      %p47 = scmp.ne.s32.totalorder %s33, %s34
      %p48 = scmp.eq.s32.totalorder %s26, 1
      %p49 = por %p47, %p48
      %p51 = scmp.ne.s32.totalorder %s34, %s50
      %p52 = scmp.eq.s32.totalorder %s26, 0
      %p53 = por %p51, %p52
      %s55 = sadd.s32 %s54, 1
      %p58 = scmp.eq.s32.totalorder %s20, 1
      %p59 = scmp.ne.s32.totalorder %s54, %s56
      %p60 = scmp.eq.s32.totalorder %s20, 0
      %p61 = por %p59, %p60
      %p62 = scmp.ne.s32.totalorder %s54, %s56
      %p63 = scmp.eq.s32.totalorder %s25, 1
      %p64 = por %p62, %p63
      %p65 = scmp.ne.s32.totalorder %s56, %s57
      %p66 = scmp.eq.s32.totalorder %s25, 0
      %p67 = por %p65, %p66
      %p68 = scmp.ne.s32.totalorder %s56, %s57
      %p69 = scmp.eq.s32.totalorder %s26, 1
      %p70 = por %p68, %p69
      %p72 = scmp.ne.s32.totalorder %s57, %s71
      %p73 = scmp.eq.s32.totalorder %s26, 0
      %p74 = por %p72, %p73
      %s76 = sadd.s32 %s75, 1
      %p79 = scmp.eq.s32.totalorder %s20, 1
      %p80 = scmp.ne.s32.totalorder %s75, %s77
      %p81 = scmp.eq.s32.totalorder %s20, 0
      %p82 = por %p80, %p81
      %p83 = scmp.ne.s32.totalorder %s75, %s77
      %p84 = scmp.eq.s32.totalorder %s25, 1
      %p85 = por %p83, %p84
      %p86 = scmp.ne.s32.totalorder %s77, %s78
      %p87 = scmp.eq.s32.totalorder %s25, 0
      %p88 = por %p86, %p87
      %p89 = scmp.ne.s32.totalorder %s77, %s78
      %p90 = scmp.eq.s32.totalorder %s26, 1
      %p91 = por %p89, %p90
      %p93 = scmp.ne.s32.totalorder %s78, %s92
      %p94 = scmp.eq.s32.totalorder %s26, 0
      %p95 = por %p93, %p94
      %s97 = sadd.s32 %s96, 1
      %p100 = scmp.eq.s32.totalorder %s20, 1
      %p101 = scmp.ne.s32.totalorder %s96, %s98
      %p102 = scmp.eq.s32.totalorder %s20, 0
      %p103 = por %p101, %p102
      %p104 = scmp.ne.s32.totalorder %s96, %s98
      %p105 = scmp.eq.s32.totalorder %s25, 1
      %p106 = por %p104, %p105
      %p107 = scmp.ne.s32.totalorder %s98, %s99
      %p108 = scmp.eq.s32.totalorder %s25, 0
      %p109 = por %p107, %p108
      %p110 = scmp.ne.s32.totalorder %s98, %s99
      %p111 = scmp.eq.s32.totalorder %s26, 1
      %p112 = por %p110, %p111
      %p114 = scmp.ne.s32.totalorder %s99, %s113
      %p115 = scmp.eq.s32.totalorder %s26, 0
      %p116 = por %p114, %p115
      %s118 = sadd.s32 %s117, 1
      %p121 = scmp.eq.s32.totalorder %s20, 1
      %p122 = scmp.ne.s32.totalorder %s117, %s119
      %p123 = scmp.eq.s32.totalorder %s20, 0
      %p124 = por %p122, %p123
      %p125 = scmp.ne.s32.totalorder %s117, %s119
      %p126 = scmp.eq.s32.totalorder %s25, 1
      %p127 = por %p125, %p126
      %p128 = scmp.ne.s32.totalorder %s119, %s120
      %p129 = scmp.eq.s32.totalorder %s25, 0
      %p130 = por %p128, %p129
      %p131 = scmp.ne.s32.totalorder %s119, %s120
      %p132 = scmp.eq.s32.totalorder %s26, 1
      %p133 = por %p131, %p132
      %p135 = scmp.ne.s32.totalorder %s120, %s134
      %p136 = scmp.eq.s32.totalorder %s26, 0
      %p137 = por %p135, %p136
      %s139 = sadd.s32 %s138, 1
      %p142 = scmp.eq.s32.totalorder %s20, 1
      %p143 = scmp.ne.s32.totalorder %s138, %s140
      %p144 = scmp.eq.s32.totalorder %s20, 0
      %p145 = por %p143, %p144
      %p146 = scmp.ne.s32.totalorder %s138, %s140
      %p147 = scmp.eq.s32.totalorder %s25, 1
      %p148 = por %p146, %p147
      %p149 = scmp.ne.s32.totalorder %s140, %s141
      %p150 = scmp.eq.s32.totalorder %s25, 0
      %p151 = por %p149, %p150
      %p152 = scmp.ne.s32.totalorder %s140, %s141
      %p153 = scmp.eq.s32.totalorder %s26, 1
      %p154 = por %p152, %p153
      %p156 = scmp.ne.s32.totalorder %s141, %s155
      %p157 = scmp.eq.s32.totalorder %s26, 0
      %p158 = por %p156, %p157
      %s159 = ssub.s32 %s20, %s27
      %p160 = scmp.eq.s32.totalorder %s159, 0
      %s162 = sadd.s32 %s161, 1
      %s163 = scalar_select %p160, %s161, %s162
      %p166 = pneg %p160
      %p167 = scmp.eq.s32.totalorder %s20, 1
      %p168 = por %p166, %p167
      %p169 = scmp.ne.s32.totalorder %s161, %s164
      %p170 = scmp.eq.s32.totalorder %s20, 0
      %p171 = por %p169, %p170
      %p172 = scmp.ne.s32.totalorder %s161, %s164
      %p173 = scmp.eq.s32.totalorder %s25, 1
      %p174 = por %p172, %p173
      %p175 = scmp.ne.s32.totalorder %s164, %s165
      %p176 = scmp.eq.s32.totalorder %s25, 0
      %p177 = por %p175, %p176
      %p178 = scmp.ne.s32.totalorder %s164, %s165
      %p179 = scmp.eq.s32.totalorder %s26, 1
      %p180 = por %p178, %p179
      %p182 = scmp.ne.s32.totalorder %s165, %s181
      %p183 = scmp.eq.s32.totalorder %s26, 0
      %p184 = por %p182, %p183
      %p185 = scmp.le.s32.totalorder 1, %s20
      %p186 = scmp.lt.s32.totalorder %s20, 3
      %p187 = pnand %p185, %p186
      %p188 = pneg %p187
      // Predicated region
      $region9: #{tpu_custom_call.1} parent=5 // pred_check
        _
      $region10: #{tpu_custom_call.1} parent=5 // pred_check_branch
        %190 = sbr.rel (%p187) target = $region12
      $region11: #{tpu_custom_call.1} parent=5 // pred_region
        %s191 = ssub.s32 %s20, 1
        // Predicated region
        $region13: #{tpu_custom_call.1} parent=11 // pred_check
          %p192 = pneg %p67
        $region14: #{tpu_custom_call.1} parent=11 // pred_check_branch
          %194 = sbr.rel (%p192) target = $region16
        $region15: #{tpu_custom_call.1} parent=11 // pred_region
          %196 = vsyncadd [#allocation7], 0
          %s197 = sshll.u32 %s1, 4
          %s198 = int_to_ptr.hbm [resolvable:$true] %s197
          %s199 = sshll.u32 [#allocation6], 4
          %s200 = int_to_ptr.vmem [resolvable:$true] %s199
          %205 = dma.hbm_to_vmem [thread:$0]  %s198, 2048, %s200, [#allocation7], 64, 64, 4
        $region16: #{tpu_custom_call.1} parent=11 // pred_fallthru
          _
        // Predicated region
        $region17: #{tpu_custom_call.1} parent=11 // pred_check
          %p206 = pneg %p88
        $region18: #{tpu_custom_call.1} parent=11 // pred_check_branch
          %208 = sbr.rel (%p206) target = $region20
        $region19: #{tpu_custom_call.1} parent=11 // pred_region
          _
        $region20: #{tpu_custom_call.1} parent=11 // pred_fallthru
          _
        // Predicated region
        $region21: #{tpu_custom_call.1} parent=11 // pred_check
          %p209 = pneg %p109
        $region22: #{tpu_custom_call.1} parent=11 // pred_check_branch
          %211 = sbr.rel (%p209) target = $region24
        $region23: #{tpu_custom_call.1} parent=11 // pred_region
          %213 = vsyncadd [#allocation7], 0
          %s214 = sshll.u32 %s3, 4
          %s215 = int_to_ptr.hbm [resolvable:$true] %s214
          %s216 = sshll.u32 [#allocation8], 4
          %s217 = int_to_ptr.vmem [resolvable:$true] %s216
          %222 = dma.hbm_to_vmem [thread:$0]  %s215, 2048, %s217, [#allocation7], 128, 128, 8
        $region24: #{tpu_custom_call.1} parent=11 // pred_fallthru
          _
        // Predicated region
        $region25: #{tpu_custom_call.1} parent=11 // pred_check
          %p223 = pneg %p130
        $region26: #{tpu_custom_call.1} parent=11 // pred_check_branch
          %225 = sbr.rel (%p223) target = $region28
        $region27: #{tpu_custom_call.1} parent=11 // pred_region
          _
        $region28: #{tpu_custom_call.1} parent=11 // pred_fallthru
          _
        // Predicated region
        $region29: #{tpu_custom_call.1} parent=11 // pred_check
          %p226 = pneg %p151
        $region30: #{tpu_custom_call.1} parent=11 // pred_check_branch
          %228 = sbr.rel (%p226) target = $region32
        $region31: #{tpu_custom_call.1} parent=11 // pred_region
          _
        $region32: #{tpu_custom_call.1} parent=11 // pred_fallthru
          _
      $region12: #{tpu_custom_call.1} parent=5 // pred_fallthru
        _
      %p229 = scmp.lt.s32.totalorder %s20, 2
      // Predicated region
      $region33: #{tpu_custom_call.1} parent=5 // pred_check
        %p230 = pneg %p229
      $region34: #{tpu_custom_call.1} parent=5 // pred_check_branch
        %232 = sbr.rel (%p230) target = $region36
      $region35: #{tpu_custom_call.1} parent=5 // pred_region
        // Predicated region
        $region37: #{tpu_custom_call.1} parent=35 // pred_check
          %p233 = pneg %p40
        $region38: #{tpu_custom_call.1} parent=35 // pred_check_branch
          %235 = sbr.rel (%p233) target = $region40
        $region39: #{tpu_custom_call.1} parent=35 // pred_region
          %s236 = sand.u32 %s30, 1
          %s237 = scalar_lea.sflag [#allocation4], %s236
          %s238 = sand.u32 %s30, 1
          %s239 = smul.addr %s238, 48
          %s240 = scalar_lea.vmem [#allocation3], %s239
          %s241 = smul.u32 3, %s20
          %243 = vsyncadd %s237, 0
          %s244 = smul.addr %s241, 2
          %s245 = smul.addr %s244, 8
          %s246 = scalar_lea.hbm %s0, %s245
          %s247 = sshll.u32 %s246, 4
          %s248 = int_to_ptr.hbm [resolvable:$true] %s247
          %s249 = sshll.u32 %s240, 4
          %s250 = int_to_ptr.vmem [resolvable:$true] %s249
          %255 = dma.hbm_to_vmem [thread:$0]  %s248, 768, %s250, %s237, 256, 256, 16
        $region40: #{tpu_custom_call.1} parent=35 // pred_fallthru
          _
      $region36: #{tpu_custom_call.1} parent=5 // pred_fallthru
        _
      %p256 = scmp.le.s32.totalorder 1, %s20
      %p257 = scmp.lt.s32.totalorder %s20, 3
      %p258 = pnand %p256, %p257
      %p259 = pneg %p258
      // Predicated region
      $region41: #{tpu_custom_call.1} parent=5 // pred_check
        _
      $region42: #{tpu_custom_call.1} parent=5 // pred_check_branch
        %261 = sbr.rel (%p258) target = $region44
      $region43: #{tpu_custom_call.1} parent=5 // pred_region
        %s262 = ssub.s32 %s20, 1
        %s263 = sand.u32 %s33, 1
        %s264 = scalar_lea.sflag [#allocation4], %s263
        %s265 = sand.u32 %s33, 1
        %s266 = smul.addr %s265, 48
        %s267 = scalar_lea.vmem [#allocation3], %s266
        // Predicated region
        $region45: #{tpu_custom_call.1} parent=43 // pred_check
          %p268 = pneg %p46
        $region46: #{tpu_custom_call.1} parent=43 // pred_check_branch
          %270 = sbr.rel (%p268) target = $region48
        $region47: #{tpu_custom_call.1} parent=43 // pred_region
          %272 = dma.done %s264, 768
        $region48: #{tpu_custom_call.1} parent=43 // pred_fallthru
          _
        // Predicated region
        $region49: #{tpu_custom_call.1} parent=43 // pred_check
          %p273 = pneg %p67
        $region50: #{tpu_custom_call.1} parent=43 // pred_check_branch
          %275 = sbr.rel (%p273) target = $region52
        $region51: #{tpu_custom_call.1} parent=43 // pred_region
          %277 = dma.done [#allocation7], 2048
        $region52: #{tpu_custom_call.1} parent=43 // pred_fallthru
          _
        // Predicated region
        $region53: #{tpu_custom_call.1} parent=43 // pred_check
          %p278 = pneg %p109
        $region54: #{tpu_custom_call.1} parent=43 // pred_check_branch
          %280 = sbr.rel (%p278) target = $region56
        $region55: #{tpu_custom_call.1} parent=43 // pred_region
          %282 = dma.done [#allocation7], 2048
        $region56: #{tpu_custom_call.1} parent=43 // pred_fallthru
          _
        %s283 = sand.u32 %s33, 1
        %s284 = scalar_lea.sflag [#allocation4], %s283
        %s285 = sand.u32 %s33, 1
        %s286 = smul.addr %s285, 48
        %s287 = scalar_lea.vmem [#allocation3], %s286
        %p288 = pneg %p46
        %p289 = pneg %p43
        %p290 = pneg %p67
        %p291 = pneg %p64
        %p292 = pneg %p88
        %p293 = pneg %p85
        %p294 = pneg %p109
        %p295 = pneg %p106
        %p296 = pneg %p130
        %p297 = pneg %p127
        %p298 = pneg %p151
        %p299 = pneg %p148
        %p300 = pneg %p177
        %p301 = pneg %p174
        %s302 = sand.u32 %s164, 1
        %s303 = scalar_lea.sflag [#allocation5], %s302
        %s304 = sand.u32 %s164, 1
        %s305 = smul.addr %s304, 48
        %s306 = scalar_lea.vmem [#allocation9], %s305
        %s307 = smul.u32 3, %s25
        %s308 = smul.u32 3, %s25
        %v309 = vld [vmem:[%s267] sm:$0xff]
        %v310 = vld [vmem:[%s267 + $0x8] sm:$0xff]
        %v311 = vld [vmem:[%s267 + $0x10] sm:$0xff]
        %v312 = vld [vmem:[%s267 + $0x18] sm:$0xff]
        %v313 = vld [vmem:[%s267 + $0x20] sm:$0xff]
        %v314 = vld [vmem:[%s267 + $0x28] sm:$0xff]
        %v315 = vpack.c.bf16 %v311, %v309
        %v316 = vpack.c.bf16 %v312, %v310
        %v317 = vpack.c.bf16 %v313, %v313
        %v318 = vpack.c.bf16 %v314, %v314
        %v319 = vld [vmem:[#allocation6] sm:$0xf]
        %v320 = vld [vmem:[#allocation6 + $0x4] sm:$0xf]
        %v321 = vld [vmem:[#allocation6 + $0x8] sm:$0xf]
        %v322 = vld [vmem:[#allocation6 + $0xc] sm:$0xf]
        %v323 = vld [vmem:[#allocation6 + $0x10] sm:$0xf]
        %v324 = vld [vmem:[#allocation6 + $0x14] sm:$0xf]
        %v325 = vld [vmem:[#allocation6 + $0x18] sm:$0xf]
        %v326 = vld [vmem:[#allocation6 + $0x1c] sm:$0xf]
        %v327 = vld [vmem:[#allocation6 + $0x20] sm:$0xf]
        %v328 = vld [vmem:[#allocation6 + $0x24] sm:$0xf]
        %v329 = vld [vmem:[#allocation6 + $0x28] sm:$0xf]
        %v330 = vld [vmem:[#allocation6 + $0x2c] sm:$0xf]
        %v331 = vld [vmem:[#allocation6 + $0x30] sm:$0xf]
        %v332 = vld [vmem:[#allocation6 + $0x34] sm:$0xf]
        %v333 = vld [vmem:[#allocation6 + $0x38] sm:$0xf]
        %v334 = vld [vmem:[#allocation6 + $0x3c] sm:$0xf]
        %v335 = vld [vmem:[#allocation6 + $0x40] sm:$0xf]
        %v336 = vld [vmem:[#allocation6 + $0x44] sm:$0xf]
        %v337 = vld [vmem:[#allocation6 + $0x48] sm:$0xf]
        %v338 = vld [vmem:[#allocation6 + $0x4c] sm:$0xf]
        %v339 = vld [vmem:[#allocation6 + $0x50] sm:$0xf]
        %v340 = vld [vmem:[#allocation6 + $0x54] sm:$0xf]
        %v341 = vld [vmem:[#allocation6 + $0x58] sm:$0xf]
        %v342 = vld [vmem:[#allocation6 + $0x5c] sm:$0xf]
        %v343 = vld [vmem:[#allocation6 + $0x60] sm:$0xf]
        %v344 = vld [vmem:[#allocation6 + $0x64] sm:$0xf]
        %v345 = vld [vmem:[#allocation6 + $0x68] sm:$0xf]
        %v346 = vld [vmem:[#allocation6 + $0x6c] sm:$0xf]
        %v347 = vld [vmem:[#allocation6 + $0x70] sm:$0xf]
        %v348 = vld [vmem:[#allocation6 + $0x74] sm:$0xf]
        %v349 = vld [vmem:[#allocation6 + $0x78] sm:$0xf]
        %v350 = vld [vmem:[#allocation6 + $0x7c] sm:$0xf]
        %v351 = vld [vmem:[%s2] sm:$0x1]
        %v353 = vperm.slane %v351, 0
        %v387 = vunpack.c.l.b16 %v319
        %v388 = vunpack.c.l.b16 %v320
        %v389 = vunpack.c.l.b16 %v321
        %v390 = vunpack.c.l.b16 %v322
        %v391 = vunpack.c.l.b16 %v323
        %v392 = vunpack.c.l.b16 %v324
        %v393 = vunpack.c.l.b16 %v325
        %v394 = vunpack.c.l.b16 %v326
        %v395 = vunpack.c.l.b16 %v327
        %v396 = vunpack.c.l.b16 %v328
        %v397 = vunpack.c.l.b16 %v329
        %v398 = vunpack.c.l.b16 %v330
        %v399 = vunpack.c.l.b16 %v331
        %v400 = vunpack.c.l.b16 %v332
        %v401 = vunpack.c.l.b16 %v333
        %v402 = vunpack.c.l.b16 %v334
        %v403 = vunpack.c.l.b16 %v335
        %v404 = vunpack.c.l.b16 %v336
        %v405 = vunpack.c.l.b16 %v337
        %v406 = vunpack.c.l.b16 %v338
        %v407 = vunpack.c.l.b16 %v339
        %v408 = vunpack.c.l.b16 %v340
        %v409 = vunpack.c.l.b16 %v341
        %v410 = vunpack.c.l.b16 %v342
        %v411 = vunpack.c.l.b16 %v343
        %v412 = vunpack.c.l.b16 %v344
        %v413 = vunpack.c.l.b16 %v345
        %v414 = vunpack.c.l.b16 %v346
        %v415 = vunpack.c.l.b16 %v347
        %v416 = vunpack.c.l.b16 %v348
        %v417 = vunpack.c.l.b16 %v349
        %v418 = vunpack.c.l.b16 %v350
        %v419 = vpack.c.b16 %v388, %v387
        %v420 = vpack.c.b16 %v390, %v389
        %v421 = vpack.c.b16 %v392, %v391
        %v422 = vpack.c.b16 %v394, %v393
        %v423 = vpack.c.b16 %v396, %v395
        %v424 = vpack.c.b16 %v398, %v397
        %v425 = vpack.c.b16 %v400, %v399
        %v426 = vpack.c.b16 %v402, %v401
        %v427 = vpack.c.b16 %v404, %v403
        %v428 = vpack.c.b16 %v406, %v405
        %v429 = vpack.c.b16 %v408, %v407
        %v430 = vpack.c.b16 %v410, %v409
        %v431 = vpack.c.b16 %v412, %v411
        %v432 = vpack.c.b16 %v414, %v413
        %v433 = vpack.c.b16 %v416, %v415
        %v434 = vpack.c.b16 %v418, %v417
        %451 = vmatpush.bf16.msra.mxu0 %v426
        %452 = vmatpush.bf16.msra.mxu0 %v425
        %453 = vmatpush.bf16.msra.mxu0 %v424
        %454 = vmatpush.bf16.msra.mxu0 %v423
        %455 = vmatpush.bf16.msra.mxu0 %v422
        %456 = vmatpush.bf16.msra.mxu0 %v421
        %457 = vmatpush.bf16.msra.mxu0 %v420
        %458 = vmatpush.bf16.msra.mxu0 %v419
        %459 = vmatmul.bf16.gmra.mxu0 %v315
        %v460 = vpop.f32.mrf.mxu0
        %v461 = vadd.f32 %v353, %v460
        %v462 = vpop.f32.mrf.mxu0
        %v463 = vadd.f32 %v353, %v462
        %464 = vmatmul.bf16.gmra.mxu0 %v317
        %v465 = vpop.f32.mrf.mxu0
        %v466 = vadd.f32 %v353, %v465
        %v467 = vpop.f32.mrf.mxu0
        %468 = vdwg.mxu0
        %469 = vmatpush.bf16.msra.mxu0 %v434
        %470 = vmatpush.bf16.msra.mxu0 %v433
        %471 = vmatpush.bf16.msra.mxu0 %v432
        %472 = vmatpush.bf16.msra.mxu0 %v431
        %473 = vmatpush.bf16.msra.mxu0 %v430
        %474 = vmatpush.bf16.msra.mxu0 %v429
        %475 = vmatpush.bf16.msra.mxu0 %v428
        %476 = vmatpush.bf16.msra.mxu0 %v427
        %477 = vmatmul.bf16.gmra.mxu0 %v316
        %v478 = vpop.f32.mrf.mxu0
        %v479 = vadd.f32 %v461, %v478
        %v480 = vpop.f32.mrf.mxu0
        %v481 = vadd.f32 %v463, %v480
        %482 = vmatmul.bf16.gmra.mxu0 %v318
        %v483 = vpop.f32.mrf.mxu0
        %v484 = vadd.f32 %v466, %v483
        %v485 = vpop.f32.mrf.mxu0
        %486 = vdwg.mxu0
        %v487 = vmax.f32 %v479, 0.0
        %v488 = vmax.f32 %v481, 0.0
        %v489 = vmax.f32 %v484, 0.0
        %v490 = vpack.c.bf16 %v488, %v487
        %v491 = vpack.c.bf16 %v489, %v489
        %v492 = vld [vmem:[#allocation8] sm:$0xff]
        %v493 = vld [vmem:[#allocation8 + $0x8] sm:$0xff]
        %v494 = vld [vmem:[#allocation8 + $0x10] sm:$0xff]
        %v495 = vld [vmem:[#allocation8 + $0x18] sm:$0xff]
        %v496 = vld [vmem:[#allocation8 + $0x20] sm:$0xff]
        %v497 = vld [vmem:[#allocation8 + $0x28] sm:$0xff]
        %v498 = vld [vmem:[#allocation8 + $0x30] sm:$0xff]
        %v499 = vld [vmem:[#allocation8 + $0x38] sm:$0xff]
        %v500 = vld [vmem:[#allocation8 + $0x40] sm:$0xff]
        %v501 = vld [vmem:[#allocation8 + $0x48] sm:$0xff]
        %v502 = vld [vmem:[#allocation8 + $0x50] sm:$0xff]
        %v503 = vld [vmem:[#allocation8 + $0x58] sm:$0xff]
        %v504 = vld [vmem:[#allocation8 + $0x60] sm:$0xff]
        %v505 = vld [vmem:[#allocation8 + $0x68] sm:$0xff]
        %v506 = vld [vmem:[#allocation8 + $0x70] sm:$0xff]
        %v507 = vld [vmem:[#allocation8 + $0x78] sm:$0xff]
        %v508 = vld [vmem:[%s4] sm:$0x3]
        %v510 = vperm.slane %v508, 0
        %v511 = vperm.slane %v508, 1
        %v530 = vunpack.c.l.b16 %v492
        %v531 = vunpack.c.h.b16 %v492
        %v532 = vunpack.c.l.b16 %v493
        %v533 = vunpack.c.h.b16 %v493
        %v534 = vunpack.c.l.b16 %v494
        %v535 = vunpack.c.h.b16 %v494
        %v536 = vunpack.c.l.b16 %v495
        %v537 = vunpack.c.h.b16 %v495
        %v538 = vunpack.c.l.b16 %v496
        %v539 = vunpack.c.h.b16 %v496
        %v540 = vunpack.c.l.b16 %v497
        %v541 = vunpack.c.h.b16 %v497
        %v542 = vunpack.c.l.b16 %v498
        %v543 = vunpack.c.h.b16 %v498
        %v544 = vunpack.c.l.b16 %v499
        %v545 = vunpack.c.h.b16 %v499
        %v546 = vunpack.c.l.b16 %v500
        %v547 = vunpack.c.h.b16 %v500
        %v548 = vunpack.c.l.b16 %v501
        %v549 = vunpack.c.h.b16 %v501
        %v550 = vunpack.c.l.b16 %v502
        %v551 = vunpack.c.h.b16 %v502
        %v552 = vunpack.c.l.b16 %v503
        %v553 = vunpack.c.h.b16 %v503
        %v554 = vunpack.c.l.b16 %v504
        %v555 = vunpack.c.h.b16 %v504
        %v556 = vunpack.c.l.b16 %v505
        %v557 = vunpack.c.h.b16 %v505
        %v558 = vunpack.c.l.b16 %v506
        %v559 = vunpack.c.h.b16 %v506
        %v560 = vunpack.c.l.b16 %v507
        %v561 = vunpack.c.h.b16 %v507
        %v562 = vpack.c.b16 %v532, %v530
        %v563 = vpack.c.b16 %v533, %v531
        %v564 = vpack.c.b16 %v536, %v534
        %v565 = vpack.c.b16 %v537, %v535
        %v566 = vpack.c.b16 %v540, %v538
        %v567 = vpack.c.b16 %v541, %v539
        %v568 = vpack.c.b16 %v544, %v542
        %v569 = vpack.c.b16 %v545, %v543
        %v570 = vpack.c.b16 %v548, %v546
        %v571 = vpack.c.b16 %v549, %v547
        %v572 = vpack.c.b16 %v552, %v550
        %v573 = vpack.c.b16 %v553, %v551
        %v574 = vpack.c.b16 %v556, %v554
        %v575 = vpack.c.b16 %v557, %v555
        %v576 = vpack.c.b16 %v560, %v558
        %v577 = vpack.c.b16 %v561, %v559
        %594 = vmatpush.bf16.msra.mxu0 %v576
        %595 = vmatpush.bf16.msra.mxu0 %v574
        %596 = vmatpush.bf16.msra.mxu0 %v572
        %597 = vmatpush.bf16.msra.mxu0 %v570
        %598 = vmatpush.bf16.msra.mxu0 %v568
        %599 = vmatpush.bf16.msra.mxu0 %v566
        %600 = vmatpush.bf16.msra.mxu0 %v564
        %601 = vmatpush.bf16.msra.mxu0 %v562
        %602 = vmatmul.bf16.gmra.mxu0 %v490
        %v603 = vpop.f32.mrf.mxu0
        %v604 = vadd.f32 %v510, %v603
        %v605 = vpop.f32.mrf.mxu0
        %v606 = vadd.f32 %v510, %v605
        %607 = vmatmul.bf16.gmra.mxu0 %v491
        %v608 = vpop.f32.mrf.mxu0
        %v609 = vadd.f32 %v510, %v608
        %v610 = vpop.f32.mrf.mxu0
        %611 = vdwg.mxu0
        %612 = vmatpush.bf16.msra.mxu0 %v577
        %613 = vmatpush.bf16.msra.mxu0 %v575
        %614 = vmatpush.bf16.msra.mxu0 %v573
        %615 = vmatpush.bf16.msra.mxu0 %v571
        %616 = vmatpush.bf16.msra.mxu0 %v569
        %617 = vmatpush.bf16.msra.mxu0 %v567
        %618 = vmatpush.bf16.msra.mxu0 %v565
        %619 = vmatpush.bf16.msra.mxu0 %v563
        %620 = vmatmul.bf16.gmra.mxu0 %v490
        %v621 = vpop.f32.mrf.mxu0
        %v622 = vadd.f32 %v511, %v621
        %v623 = vpop.f32.mrf.mxu0
        %v624 = vadd.f32 %v511, %v623
        %625 = vmatmul.bf16.gmra.mxu0 %v491
        %v626 = vpop.f32.mrf.mxu0
        %v627 = vadd.f32 %v511, %v626
        %v628 = vpop.f32.mrf.mxu0
        %629 = vdwg.mxu0
        %v630 = vmax.f32 %v604, 0.0
        %v631 = vmax.f32 %v622, 0.0
        %v632 = vmax.f32 %v606, 0.0
        %v633 = vmax.f32 %v624, 0.0
        %v634 = vmax.f32 %v609, 0.0
        %v635 = vmax.f32 %v627, 0.0
        %s636 = sld [smem:[#allocation2]]
        %v637 = vsub.f32 %v630, %v309
        %v638 = vsub.f32 %v631, %v310
        %v639 = vsub.f32 %v632, %v311
        %v640 = vsub.f32 %v633, %v312
        %v641 = vsub.f32 %v634, %v313
        %v642 = vsub.f32 %v635, %v314
        %v643 = vstv %s636
        %v644 = vmul.f32 %v643, %v637
        %v645 = vmul.f32 %v643, %v638
        %v646 = vmul.f32 %v643, %v639
        %v647 = vmul.f32 %v643, %v640
        %v648 = vmul.f32 %v643, %v641
        %v649 = vmul.f32 %v643, %v642
        %v650 = vadd.f32 %v309, %v644
        %v651 = vadd.f32 %v310, %v645
        %v652 = vadd.f32 %v311, %v646
        %v653 = vadd.f32 %v312, %v647
        %v654 = vadd.f32 %v313, %v648
        %v655 = vadd.f32 %v314, %v649
        %656 = vst [vmem:[%s306] sm:$0xff] %v650
        %657 = vst [vmem:[%s306 + $0x8] sm:$0xff] %v651
        %658 = vst [vmem:[%s306 + $0x10] sm:$0xff] %v652
        %659 = vst [vmem:[%s306 + $0x18] sm:$0xff] %v653
        %660 = vst [vmem:[%s306 + $0x20] sm:$0xff] %v654
        %661 = vst [vmem:[%s306 + $0x28] sm:$0xff] %v655
        %s662 = sand.u32 %s164, 1
        %s663 = scalar_lea.sflag [#allocation5], %s662
        %s664 = sand.u32 %s164, 1
        %s665 = smul.addr %s664, 48
        %s666 = scalar_lea.vmem [#allocation9], %s665
        // Predicated region
        $region57: #{tpu_custom_call.1} parent=43 // pred_check
          %p667 = pneg %p174
        $region58: #{tpu_custom_call.1} parent=43 // pred_check_branch
          %669 = sbr.rel (%p667) target = $region60
        $region59: #{tpu_custom_call.1} parent=43 // pred_region
          %s670 = smul.u32 3, %s25
          %672 = vsyncadd %s663, 0
          %s673 = smul.addr %s670, 2
          %s674 = smul.addr %s673, 8
          %s675 = scalar_lea.hbm %s6, %s674
          %s676 = sshll.u32 %s666, 4
          %s677 = int_to_ptr.vmem [resolvable:$true] %s676
          %s678 = sshll.u32 %s675, 4
          %s679 = int_to_ptr.hbm [resolvable:$true] %s678
          %684 = dma.vmem_to_hbm [thread:$0]  %s677, 768, %s679, %s663, 256, 256, 16
        $region60: #{tpu_custom_call.1} parent=43 // pred_fallthru
          _
      $region44: #{tpu_custom_call.1} parent=5 // pred_fallthru
        _
      %p685 = scmp.le.s32.totalorder 2, %s20
      // Predicated region
      $region61: #{tpu_custom_call.1} parent=5 // pred_check
        %p686 = pneg %p685
      $region62: #{tpu_custom_call.1} parent=5 // pred_check_branch
        %688 = sbr.rel (%p686) target = $region64
      $region63: #{tpu_custom_call.1} parent=5 // pred_region
        %s689 = ssub.s32 %s20, 2
        // Predicated region
        $region65: #{tpu_custom_call.1} parent=63 // pred_check
          %p690 = pneg %p180
        $region66: #{tpu_custom_call.1} parent=63 // pred_check_branch
          %692 = sbr.rel (%p690) target = $region68
        $region67: #{tpu_custom_call.1} parent=63 // pred_region
          %s693 = sand.u32 %s165, 1
          %s694 = scalar_lea.sflag [#allocation5], %s693
          %s695 = sand.u32 %s165, 1
          %s696 = smul.addr %s695, 48
          %s697 = scalar_lea.vmem [#allocation9], %s696
          %699 = dma.done %s694, 768
        $region68: #{tpu_custom_call.1} parent=63 // pred_fallthru
          _
      $region64: #{tpu_custom_call.1} parent=5 // pred_fallthru
        _
    $region6: #{tpu_custom_call.1} parent=1 // loop_footer
      %s24 = sadd.s32 1, %s20
    $region7: #{tpu_custom_call.1} parent=1 // loop_footer_branch
      %19 = sbr.rel target = $region3
    $region8: #{tpu_custom_call.1} parent=1 // loop_exit
      _
    %700 = vsyncpa [#allocation4], 1
    %s701 = scalar_lea.sflag [#allocation4], 1
    %702 = vsyncpa %s701, 1
    %703 = vsyncpa [#allocation7], 1
    %704 = vsyncpa [#allocation5], 1
    %s705 = scalar_lea.sflag [#allocation5], 1
    %706 = vsyncpa %s705, 1

</llo_original>
